<compile_context>
chip_gen: v7x
topology: tpu7x:2x2x1
jax: 0.10.0
libtpu: 0.0.40
codegen_flags: <defaults>
</compile_context>

<pallas_src>
import jax
import jax.numpy as jnp
from jax.experimental import pallas as pl
from jax.experimental.pallas import tpu as pltpu

F_TREE = 22 * 18 + 2                      # 398 features per (weight, tree) block
N_TREES = 5
N_WEIGHTS = 2
N_BLOCKS = N_WEIGHTS * N_TREES            # 10 blocks
F_TOTAL = N_BLOCKS * F_TREE               # 3980
F_CAT = 22 * 2 + 2                        # 46 raw features fed to weight_layer
F_CAT_PAD = 128                           # padded to one full lane group


def index_flat(weight, tree, index=0, subtree=None, agg=0):
    base = weight * 5 * F_TREE + tree * F_TREE
    if subtree is None:
        return base + index
    elif subtree < 2:
        return base + 2 + 22 * subtree + index
    else:
        subset = subtree - 2
        return base + 2 + 22 * 2 + 22 * 4 * subset + agg * 22 + index


def _round_up(x, m):
    return (x + m - 1) // m * m


def _cdiv(a, b):
    return (a + b - 1) // b


def _nn_kernel(x_ref, w1_ref, b1_ref, w2a_ref, w2b_ref, b2_ref,
               w3_ref, b3_ref, w4_ref, b4_ref, out_ref):
    """Full forward pass for one batch tile; all weights are VMEM resident."""
    nblk, tb, ftree = x_ref.shape         # (10, TB, 398)
    h1 = w1_ref.shape[1]
    h2 = b2_ref.shape[1]
    h3 = b3_ref.shape[1]
    cdt = x_ref.dtype                     # compute dtype (bf16 default, or f32)

    x3 = x_ref[...]                                        # (10, TB, 398)

    # ---- tree_layer: all 10 (weight, tree) blocks in ONE MXU matmul (K=398)
    x_flat = x3.reshape(nblk * tb, ftree)                  # leading-dim merge
    h1_all = jnp.maximum(
        jnp.dot(x_flat, w1_ref[...], preferred_element_type=jnp.float32)
        + b1_ref[...],                                     # bias added once
        0.0)                                               # (10*TB, h1) f32
    h1_all = h1_all.reshape(N_WEIGHTS, N_TREES * tb, h1)

    # ---- weight_layer: all 5 trees folded into the M dimension ------------
    # Raw-x half is the first full lane group (cols 0..127); w2a rows 46..127
    # are zero, so the extra columns contribute nothing.
    xw = x3.reshape(N_WEIGHTS, N_TREES * tb, ftree)
    z2 = None
    for w in range(N_WEIGHTS):
        d = jnp.dot(xw[w, :, :F_CAT_PAD], w2a_ref[w],
                    preferred_element_type=jnp.float32)
        d = d + jnp.dot(h1_all[w].astype(cdt), w2b_ref[w],
                        preferred_element_type=jnp.float32)
        z2 = d if z2 is None else z2 + d
    h2_all = jnp.maximum(z2 + b2_ref[...], 0.0)            # (5*TB, h2) f32
    h2_all = h2_all.reshape(N_TREES, tb, h2)

    # ---- final_layer Linear(5*h2, h3): sum of per-tree matmuls ------------
    z3 = None
    for t in range(N_TREES):
        d = jnp.dot(h2_all[t].astype(cdt), w3_ref[t],
                    preferred_element_type=jnp.float32)
        z3 = d if z3 is None else z3 + d
    h3v = jnp.maximum(z3 + b3_ref[...], 0.0)               # (TB, h3) f32

    # ---- final Linear(h3, 1): VPU multiply + reduce, lane-dense (1, TB) ---
    # prod.T is one XLU transpose per tile; expected to ride under the x DMA
    # slack (revisit only if a bundle dump shows XLU near the critical path).
    prod = h3v * w4_ref[...]                               # (TB, h3) on the VPU
    out_ref[...] = (jnp.sum(prod.T, axis=0, keepdims=True)  # (1, TB) lane-dense
                    + b4_ref[...]).astype(out_ref.dtype)


def neural_network_dropout(x, params, *, h1, h2, h3,
                           block_b=512, compute_dtype=jnp.bfloat16):
    """Pallas forward pass. x: (B, 3980) float32 -> (B, 1) float32.

    block_b: batch tile.  bf16 + tb=512 keeps double-buffered x at ~8 MB
    (safe on v7x's 64 MiB VMEM).  f32 should stay at tb<=512 on v7x; tb=1024
    sweeps on v5e/v6e are handled by the computed vmem_limit below.
    """
    B = x.shape[0]
    assert x.shape[1] == F_TOTAL, x.shape

    # Batch tile: multiple of 16 (bf16 packing); multiple of 128 when more
    # than one tile so the lane-dense output block stays aligned.  Prefer
    # >=2 tiles when B is large enough so the "parallel" grid axis can shard
    # across both TensorCores on v7x (no effect on single-TC v5e/v6e).
    tb = min(block_b, _round_up(B, 16))
    if tb >= B and B >= 256:
        tb = _round_up(_cdiv(B, 2), 128)
    if tb < B:
        tb = _round_up(tb, 128)
    b_pad = _round_up(B, tb)
    n_tiles = b_pad // tb

    # x repack: (B, 3980) -> (10, B_pad, 398) in compute_dtype.  With
    # allow_input_fusion XLA can fuse this into the pallas operand when the
    # caller is jitted (no extra HBM round-trip); otherwise the copy is
    # half-size in bf16 and carries no lane padding.
    xp = x if b_pad == B else jnp.pad(x, ((0, b_pad - B), (0, 0)))
    x3 = xp.reshape(b_pad, N_BLOCKS, F_TREE).transpose(1, 0, 2).astype(compute_dtype)

    seg = h1 + F_CAT
    w2 = params["w2"]
    w1c = params["w1"].astype(compute_dtype)                          # (398, h1)
    w2a = jnp.stack([
        jnp.pad(w2[w * seg:w * seg + F_CAT], ((0, F_CAT_PAD - F_CAT), (0, 0)))
        for w in range(N_WEIGHTS)]).astype(compute_dtype)             # (2, 128, h2)
    w2b = jnp.stack([
        w2[w * seg + F_CAT:(w + 1) * seg] for w in range(N_WEIGHTS)
    ]).astype(compute_dtype)                                          # (2, h1, h2)
    w3r = params["w3"].reshape(N_TREES, h2, h3).astype(compute_dtype)
    w4r = params["w4"].reshape(1, h3).astype(jnp.float32)             # epilogue f32
    b1, b2, b3, b4 = params["b1"], params["b2"], params["b3"], params["b4"]

    itemsize = jnp.dtype(compute_dtype).itemsize
    flops = int(2 * b_pad * (N_BLOCKS * F_TREE * h1
                             + N_TREES * N_WEIGHTS * (F_CAT_PAD + h1) * h2
                             + N_TREES * h2 * h3
                             + h3))
    bytes_accessed = int(x3.size * itemsize
                         + (w1c.size + w2a.size + w2b.size + w3r.size) * itemsize
                         + (b1.size + b2.size + b3.size + b4.size + h3) * 4
                         + b_pad * 4)

    # VMEM budget: double-buffered x tile + resident weights + f32
    # intermediates + slack for possible in-kernel reshape copies.
    x_tile_bytes = N_BLOCKS * tb * F_TREE * itemsize
    w_bytes = int(w1c.size + w2a.size + w2b.size + w3r.size) * itemsize
    interm_bytes = 4 * tb * (N_BLOCKS * h1 + 2 * N_TREES * h2 + h3) + 2 * x_tile_bytes
    vmem_limit = int(min(max(2 * x_tile_bytes + w_bytes + interm_bytes + (8 << 20),
                             32 << 20), 100 << 20))

    grid_spec = pltpu.PrefetchScalarGridSpec(
        num_scalar_prefetch=0,
        grid=(n_tiles,),
        in_specs=[
            # x: tiled along batch, double-buffered by the Pallas pipeline.
            pl.BlockSpec((N_BLOCKS, tb, F_TREE), lambda i: (0, i, 0)),
            # weights / biases: constant index_map -> stay VMEM resident.
            pl.BlockSpec((F_TREE, h1), lambda i: (0, 0)),
            pl.BlockSpec((1, h1), lambda i: (0, 0)),
            pl.BlockSpec((N_WEIGHTS, F_CAT_PAD, h2), lambda i: (0, 0, 0)),
            pl.BlockSpec((N_WEIGHTS, h1, h2), lambda i: (0, 0, 0)),
            pl.BlockSpec((1, h2), lambda i: (0, 0)),
            pl.BlockSpec((N_TREES, h2, h3), lambda i: (0, 0, 0)),
            pl.BlockSpec((1, h3), lambda i: (0, 0)),
            pl.BlockSpec((1, h3), lambda i: (0, 0)),
            pl.BlockSpec((1, 1), lambda i: (0, 0)),
        ],
        out_specs=pl.BlockSpec((1, tb), lambda i: (0, i)),
    )

    out = pl.pallas_call(
        _nn_kernel,
        out_shape=jax.ShapeDtypeStruct((1, b_pad), jnp.float32),
        grid_spec=grid_spec,
        compiler_params=pltpu.CompilerParams(
            dimension_semantics=("parallel",),        # megacore sharding on v7x
            vmem_limit_bytes=vmem_limit,
            allow_input_fusion=[True] + [False] * 9), # fuse x repack into operand
        cost_estimate=pl.CostEstimate(
            flops=flops, transcendentals=0, bytes_accessed=bytes_accessed),
    )(x3, w1c, b1, w2a, w2b, b2, w3r, b3, w4r, b4)

    return out[0, :B].reshape(B, 1)


def init_params(key, h1, h2, h3):
    """Deterministic PyTorch-Linear-style init; weights stored as (in, out)."""
    ks = jax.random.split(key, 8)

    def lin(kw, kb, fan_in, fan_out):
        lim = 1.0 / float(fan_in) ** 0.5
        w = jax.random.uniform(kw, (fan_in, fan_out), jnp.float32, -lim, lim)
        b = jax.random.uniform(kb, (1, fan_out), jnp.float32, -lim, lim)
        return w, b

    w1, b1 = lin(ks[0], ks[1], F_TREE, h1)
    w2, b2 = lin(ks[2], ks[3], (h1 + 22 * 2 + 2) * 2, h2)
    w3, b3 = lin(ks[4], ks[5], h2 * 5, h3)
    w4, b4 = lin(ks[6], ks[7], h3, 1)
    return dict(w1=w1, b1=b1, w2=w2, b2=b2, w3=w3, b3=b3, w4=w4, b4=b4)


def reference_forward(x, p):
    """Pure-JAX mirror of the PyTorch forward (eval mode), for validation."""
    h2s = []
    for tree in range(N_TREES):
        feats = []
        for weight in range(N_WEIGHTS):
            base = index_flat(weight, tree)
            feats.append(x[:, base:base + 2])
            feats.append(x[:, base + 2:base + 2 + 44])
            feats.append(jnp.maximum(x[:, base:base + F_TREE] @ p["w1"] + p["b1"], 0.0))
        f = jnp.concatenate(feats, axis=1)
        h2s.append(jnp.maximum(f @ p["w2"] + p["b2"], 0.0))
    h = jnp.concatenate(h2s, axis=1)
    h3v = jnp.maximum(h @ p["w3"] + p["b3"], 0.0)
    return h3v @ p["w4"] + p["b4"]


if __name__ == "__main__":
    H1, H2, H3 = 32, 32, 32
    key = jax.random.PRNGKey(0)
    kx, kp, kx2, kx3 = jax.random.split(key, 4)
    params = init_params(kp, H1, H2, H3)

    # jit so the x repack can fuse into the pallas operand (allow_input_fusion).
    fwd = jax.jit(neural_network_dropout,
                  static_argnames=("h1", "h2", "h3", "block_b", "compute_dtype"))

    # 1) Small single-tile case, f32 compute: tight check vs pure-JAX reference.
    B = 16
    x = jax.random.normal(kx, (B, F_TOTAL), jnp.float32)
    out = jax.block_until_ready(fwd(x, params, h1=H1, h2=H2, h3=H3,
                                    compute_dtype=jnp.float32))
    ref = reference_forward(x, params)
    assert out.shape == (B, 1)
    assert jnp.allclose(out, ref, atol=1e-4, rtol=1e-4), (out, ref)

    # 2) Multi-tile case with the bf16 default: exercises the batch grid,
    #    batch padding/slicing and the half-width x DMA path (loose check).
    B2 = 200
    x2 = jax.random.normal(kx2, (B2, F_TOTAL), jnp.float32)
    out2 = jax.block_until_ready(fwd(x2, params, h1=H1, h2=H2, h3=H3, block_b=128))
    ref2 = reference_forward(x2, params)
    assert out2.shape == (B2, 1)
    assert jnp.allclose(out2, ref2, atol=1e-1, rtol=1e-1)

    # 3) Batch that fits one default tile: exercises the >=2-tile split so the
    #    parallel grid axis can use both TensorCores on v7x.
    B3 = 300
    xc = jax.random.normal(kx3, (B3, F_TOTAL), jnp.float32)
    out3 = jax.block_until_ready(fwd(xc, params, h1=H1, h2=H2, h3=H3))
    ref3 = reference_forward(xc, params)
    assert out3.shape == (B3, 1)
    assert jnp.allclose(out3, ref3, atol=1e-1, rtol=1e-1)

    print("KERNEL_OK")
</pallas_src>

<mosaic_0001>
module attributes {stable_mosaic.version = 11 : i64} {
  func.func @_nn_kernel(%arg0: i32, %arg1: memref<10x16x398xf32, #tpu.memory_space<vmem>>, %arg2: memref<398x32xf32, #tpu.memory_space<vmem>>, %arg3: memref<1x32xf32, #tpu.memory_space<vmem>>, %arg4: memref<2x128x32xf32, #tpu.memory_space<vmem>>, %arg5: memref<2x32x32xf32, #tpu.memory_space<vmem>>, %arg6: memref<1x32xf32, #tpu.memory_space<vmem>>, %arg7: memref<5x32x32xf32, #tpu.memory_space<vmem>>, %arg8: memref<1x32xf32, #tpu.memory_space<vmem>>, %arg9: memref<1x32xf32, #tpu.memory_space<vmem>>, %arg10: memref<1x1xf32, #tpu.memory_space<vmem>>, %arg11: memref<1x16xf32, #tpu.memory_space<vmem>>) attributes {dimension_semantics = [#tpu.dimension_semantics<parallel>], iteration_bounds = array<i64: 1>, scalar_prefetch = 0 : i64, scratch_operands = 0 : i64, tpu.core_type = #tpu.core_type<tc>, window_params = [{transform_indices = @transform_0, window_bounds = array<i64: 10, 16, 398>}, {pipeline_mode = #tpu.pipeline_mode<synchronous>, transform_indices = @transform_1, window_bounds = array<i64: 398, 32>}, {pipeline_mode = #tpu.pipeline_mode<synchronous>, transform_indices = @transform_2, window_bounds = array<i64: 1, 32>}, {pipeline_mode = #tpu.pipeline_mode<synchronous>, transform_indices = @transform_3, window_bounds = array<i64: 2, 128, 32>}, {pipeline_mode = #tpu.pipeline_mode<synchronous>, transform_indices = @transform_4, window_bounds = array<i64: 2, 32, 32>}, {pipeline_mode = #tpu.pipeline_mode<synchronous>, transform_indices = @transform_5, window_bounds = array<i64: 1, 32>}, {pipeline_mode = #tpu.pipeline_mode<synchronous>, transform_indices = @transform_6, window_bounds = array<i64: 5, 32, 32>}, {pipeline_mode = #tpu.pipeline_mode<synchronous>, transform_indices = @transform_7, window_bounds = array<i64: 1, 32>}, {pipeline_mode = #tpu.pipeline_mode<synchronous>, transform_indices = @transform_8, window_bounds = array<i64: 1, 32>}, {pipeline_mode = #tpu.pipeline_mode<synchronous>, transform_indices = @transform_9, window_bounds = array<i64: 1, 1>}, {transform_indices = @transform_10, window_bounds = array<i64: 1, 16>}]} {
    %c0 = arith.constant 0 : index
    %c0_0 = arith.constant 0 : index
    %c0_1 = arith.constant 0 : index
    %0 = vector.load %arg1[%c0, %c0_0, %c0_1] : memref<10x16x398xf32, #tpu.memory_space<vmem>>, vector<10x16x398xf32>
    %1 = vector.shape_cast %0 : vector<10x16x398xf32> to vector<160x398xf32>
    %c0_2 = arith.constant 0 : index
    %c0_3 = arith.constant 0 : index
    %2 = vector.load %arg2[%c0_2, %c0_3] : memref<398x32xf32, #tpu.memory_space<vmem>>, vector<398x32xf32>
    %cst = arith.constant dense<0.000000e+00> : vector<160x32xf32>
    %3 = tpu.matmul %1, %2, %cst {dimension_numbers = #tpu.dot_dimension_numbers<[1], [0], [0], [1], [0, 0, 1, 1], [], []>} : vector<160x398xf32>, vector<398x32xf32>, vector<160x32xf32> -> vector<160x32xf32>
    %c0_4 = arith.constant 0 : index
    %c0_5 = arith.constant 0 : index
    %4 = vector.load %arg3[%c0_4, %c0_5] : memref<1x32xf32, #tpu.memory_space<vmem>>, vector<1x32xf32>
    %5 = vector.broadcast %4 : vector<1x32xf32> to vector<160x32xf32>
    %6 = arith.addf %3, %5 : vector<160x32xf32>
    %cst_6 = arith.constant 0.000000e+00 : f32
    %7 = vector.broadcast %cst_6 : f32 to vector<160x32xf32>
    %8 = arith.maximumf %6, %7 : vector<160x32xf32>
    %9 = vector.shape_cast %8 : vector<160x32xf32> to vector<2x80x32xf32>
    %10 = vector.shape_cast %0 : vector<10x16x398xf32> to vector<2x80x398xf32>
    %11 = vector.extract_strided_slice %10 {offsets = [0, 0, 0], sizes = [1, 80, 128], strides = [1, 1, 1]} : vector<2x80x398xf32> to vector<1x80x128xf32>
    %12 = vector.shape_cast %11 : vector<1x80x128xf32> to vector<80x128xf32>
    %c0_7 = arith.constant 0 : index
    %c0_8 = arith.constant 0 : index
    %c0_9 = arith.constant 0 : index
    %13 = vector.load %arg4[%c0_7, %c0_8, %c0_9] : memref<2x128x32xf32, #tpu.memory_space<vmem>>, vector<1x128x32xf32>
    %14 = vector.shape_cast %13 : vector<1x128x32xf32> to vector<128x32xf32>
    %cst_10 = arith.constant dense<0.000000e+00> : vector<80x32xf32>
    %15 = tpu.matmul %12, %14, %cst_10 {dimension_numbers = #tpu.dot_dimension_numbers<[1], [0], [0], [1], [0, 0, 1, 1], [], []>} : vector<80x128xf32>, vector<128x32xf32>, vector<80x32xf32> -> vector<80x32xf32>
    %16 = vector.extract_strided_slice %9 {offsets = [0, 0, 0], sizes = [1, 80, 32], strides = [1, 1, 1]} : vector<2x80x32xf32> to vector<1x80x32xf32>
    %17 = vector.shape_cast %16 : vector<1x80x32xf32> to vector<80x32xf32>
    %c0_11 = arith.constant 0 : index
    %c0_12 = arith.constant 0 : index
    %c0_13 = arith.constant 0 : index
    %18 = vector.load %arg5[%c0_11, %c0_12, %c0_13] : memref<2x32x32xf32, #tpu.memory_space<vmem>>, vector<1x32x32xf32>
    %19 = vector.shape_cast %18 : vector<1x32x32xf32> to vector<32x32xf32>
    %cst_14 = arith.constant dense<0.000000e+00> : vector<80x32xf32>
    %20 = tpu.matmul %17, %19, %cst_14 {dimension_numbers = #tpu.dot_dimension_numbers<[1], [0], [0], [1], [0, 0, 1, 1], [], []>} : vector<80x32xf32>, vector<32x32xf32>, vector<80x32xf32> -> vector<80x32xf32>
    %21 = arith.addf %15, %20 : vector<80x32xf32>
    %22 = vector.extract_strided_slice %10 {offsets = [1, 0, 0], sizes = [1, 80, 128], strides = [1, 1, 1]} : vector<2x80x398xf32> to vector<1x80x128xf32>
    %23 = vector.shape_cast %22 : vector<1x80x128xf32> to vector<80x128xf32>
    %c1 = arith.constant 1 : index
    %c0_15 = arith.constant 0 : index
    %c0_16 = arith.constant 0 : index
    %24 = vector.load %arg4[%c1, %c0_15, %c0_16] : memref<2x128x32xf32, #tpu.memory_space<vmem>>, vector<1x128x32xf32>
    %25 = vector.shape_cast %24 : vector<1x128x32xf32> to vector<128x32xf32>
    %cst_17 = arith.constant dense<0.000000e+00> : vector<80x32xf32>
    %26 = tpu.matmul %23, %25, %cst_17 {dimension_numbers = #tpu.dot_dimension_numbers<[1], [0], [0], [1], [0, 0, 1, 1], [], []>} : vector<80x128xf32>, vector<128x32xf32>, vector<80x32xf32> -> vector<80x32xf32>
    %27 = vector.extract_strided_slice %9 {offsets = [1, 0, 0], sizes = [1, 80, 32], strides = [1, 1, 1]} : vector<2x80x32xf32> to vector<1x80x32xf32>
    %28 = vector.shape_cast %27 : vector<1x80x32xf32> to vector<80x32xf32>
    %c1_18 = arith.constant 1 : index
    %c0_19 = arith.constant 0 : index
    %c0_20 = arith.constant 0 : index
    %29 = vector.load %arg5[%c1_18, %c0_19, %c0_20] : memref<2x32x32xf32, #tpu.memory_space<vmem>>, vector<1x32x32xf32>
    %30 = vector.shape_cast %29 : vector<1x32x32xf32> to vector<32x32xf32>
    %cst_21 = arith.constant dense<0.000000e+00> : vector<80x32xf32>
    %31 = tpu.matmul %28, %30, %cst_21 {dimension_numbers = #tpu.dot_dimension_numbers<[1], [0], [0], [1], [0, 0, 1, 1], [], []>} : vector<80x32xf32>, vector<32x32xf32>, vector<80x32xf32> -> vector<80x32xf32>
    %32 = arith.addf %26, %31 : vector<80x32xf32>
    %33 = arith.addf %21, %32 : vector<80x32xf32>
    %c0_22 = arith.constant 0 : index
    %c0_23 = arith.constant 0 : index
    %34 = vector.load %arg6[%c0_22, %c0_23] : memref<1x32xf32, #tpu.memory_space<vmem>>, vector<1x32xf32>
    %35 = vector.broadcast %34 : vector<1x32xf32> to vector<80x32xf32>
    %36 = arith.addf %33, %35 : vector<80x32xf32>
    %cst_24 = arith.constant 0.000000e+00 : f32
    %37 = vector.broadcast %cst_24 : f32 to vector<80x32xf32>
    %38 = arith.maximumf %36, %37 : vector<80x32xf32>
    %39 = vector.shape_cast %38 : vector<80x32xf32> to vector<5x16x32xf32>
    %40 = vector.extract_strided_slice %39 {offsets = [0, 0, 0], sizes = [1, 16, 32], strides = [1, 1, 1]} : vector<5x16x32xf32> to vector<1x16x32xf32>
    %41 = vector.shape_cast %40 : vector<1x16x32xf32> to vector<16x32xf32>
    %c0_25 = arith.constant 0 : index
    %c0_26 = arith.constant 0 : index
    %c0_27 = arith.constant 0 : index
    %42 = vector.load %arg7[%c0_25, %c0_26, %c0_27] : memref<5x32x32xf32, #tpu.memory_space<vmem>>, vector<1x32x32xf32>
    %43 = vector.shape_cast %42 : vector<1x32x32xf32> to vector<32x32xf32>
    %cst_28 = arith.constant dense<0.000000e+00> : vector<16x32xf32>
    %44 = tpu.matmul %41, %43, %cst_28 {dimension_numbers = #tpu.dot_dimension_numbers<[1], [0], [0], [1], [0, 0, 1, 1], [], []>} : vector<16x32xf32>, vector<32x32xf32>, vector<16x32xf32> -> vector<16x32xf32>
    %45 = vector.extract_strided_slice %39 {offsets = [1, 0, 0], sizes = [1, 16, 32], strides = [1, 1, 1]} : vector<5x16x32xf32> to vector<1x16x32xf32>
    %46 = vector.shape_cast %45 : vector<1x16x32xf32> to vector<16x32xf32>
    %c1_29 = arith.constant 1 : index
    %c0_30 = arith.constant 0 : index
    %c0_31 = arith.constant 0 : index
    %47 = vector.load %arg7[%c1_29, %c0_30, %c0_31] : memref<5x32x32xf32, #tpu.memory_space<vmem>>, vector<1x32x32xf32>
    %48 = vector.shape_cast %47 : vector<1x32x32xf32> to vector<32x32xf32>
    %cst_32 = arith.constant dense<0.000000e+00> : vector<16x32xf32>
    %49 = tpu.matmul %46, %48, %cst_32 {dimension_numbers = #tpu.dot_dimension_numbers<[1], [0], [0], [1], [0, 0, 1, 1], [], []>} : vector<16x32xf32>, vector<32x32xf32>, vector<16x32xf32> -> vector<16x32xf32>
    %50 = arith.addf %44, %49 : vector<16x32xf32>
    %51 = vector.extract_strided_slice %39 {offsets = [2, 0, 0], sizes = [1, 16, 32], strides = [1, 1, 1]} : vector<5x16x32xf32> to vector<1x16x32xf32>
    %52 = vector.shape_cast %51 : vector<1x16x32xf32> to vector<16x32xf32>
    %c2 = arith.constant 2 : index
    %c0_33 = arith.constant 0 : index
    %c0_34 = arith.constant 0 : index
    %53 = vector.load %arg7[%c2, %c0_33, %c0_34] : memref<5x32x32xf32, #tpu.memory_space<vmem>>, vector<1x32x32xf32>
    %54 = vector.shape_cast %53 : vector<1x32x32xf32> to vector<32x32xf32>
    %cst_35 = arith.constant dense<0.000000e+00> : vector<16x32xf32>
    %55 = tpu.matmul %52, %54, %cst_35 {dimension_numbers = #tpu.dot_dimension_numbers<[1], [0], [0], [1], [0, 0, 1, 1], [], []>} : vector<16x32xf32>, vector<32x32xf32>, vector<16x32xf32> -> vector<16x32xf32>
    %56 = arith.addf %50, %55 : vector<16x32xf32>
    %57 = vector.extract_strided_slice %39 {offsets = [3, 0, 0], sizes = [1, 16, 32], strides = [1, 1, 1]} : vector<5x16x32xf32> to vector<1x16x32xf32>
    %58 = vector.shape_cast %57 : vector<1x16x32xf32> to vector<16x32xf32>
    %c3 = arith.constant 3 : index
    %c0_36 = arith.constant 0 : index
    %c0_37 = arith.constant 0 : index
    %59 = vector.load %arg7[%c3, %c0_36, %c0_37] : memref<5x32x32xf32, #tpu.memory_space<vmem>>, vector<1x32x32xf32>
    %60 = vector.shape_cast %59 : vector<1x32x32xf32> to vector<32x32xf32>
    %cst_38 = arith.constant dense<0.000000e+00> : vector<16x32xf32>
    %61 = tpu.matmul %58, %60, %cst_38 {dimension_numbers = #tpu.dot_dimension_numbers<[1], [0], [0], [1], [0, 0, 1, 1], [], []>} : vector<16x32xf32>, vector<32x32xf32>, vector<16x32xf32> -> vector<16x32xf32>
    %62 = arith.addf %56, %61 : vector<16x32xf32>
    %63 = vector.extract_strided_slice %39 {offsets = [4, 0, 0], sizes = [1, 16, 32], strides = [1, 1, 1]} : vector<5x16x32xf32> to vector<1x16x32xf32>
    %64 = vector.shape_cast %63 : vector<1x16x32xf32> to vector<16x32xf32>
    %c4 = arith.constant 4 : index
    %c0_39 = arith.constant 0 : index
    %c0_40 = arith.constant 0 : index
    %65 = vector.load %arg7[%c4, %c0_39, %c0_40] : memref<5x32x32xf32, #tpu.memory_space<vmem>>, vector<1x32x32xf32>
    %66 = vector.shape_cast %65 : vector<1x32x32xf32> to vector<32x32xf32>
    %cst_41 = arith.constant dense<0.000000e+00> : vector<16x32xf32>
    %67 = tpu.matmul %64, %66, %cst_41 {dimension_numbers = #tpu.dot_dimension_numbers<[1], [0], [0], [1], [0, 0, 1, 1], [], []>} : vector<16x32xf32>, vector<32x32xf32>, vector<16x32xf32> -> vector<16x32xf32>
    %68 = arith.addf %62, %67 : vector<16x32xf32>
    %c0_42 = arith.constant 0 : index
    %c0_43 = arith.constant 0 : index
    %69 = vector.load %arg8[%c0_42, %c0_43] : memref<1x32xf32, #tpu.memory_space<vmem>>, vector<1x32xf32>
    %70 = vector.broadcast %69 : vector<1x32xf32> to vector<16x32xf32>
    %71 = arith.addf %68, %70 : vector<16x32xf32>
    %cst_44 = arith.constant 0.000000e+00 : f32
    %72 = vector.broadcast %cst_44 : f32 to vector<16x32xf32>
    %73 = arith.maximumf %71, %72 : vector<16x32xf32>
    %c0_45 = arith.constant 0 : index
    %c0_46 = arith.constant 0 : index
    %74 = vector.load %arg9[%c0_45, %c0_46] : memref<1x32xf32, #tpu.memory_space<vmem>>, vector<1x32xf32>
    %75 = vector.broadcast %74 : vector<1x32xf32> to vector<16x32xf32>
    %76 = arith.mulf %73, %75 : vector<16x32xf32>
    %77 = tpu.transpose %76, [1, 0] : vector<16x32xf32> -> vector<32x16xf32>
    %cst_47 = arith.constant dense<0.000000e+00> : vector<16xf32>
    %78 = vector.multi_reduction <add>, %77, %cst_47 [0] : vector<32x16xf32> to vector<16xf32>
    %79 = vector.shape_cast %78 : vector<16xf32> to vector<1x16xf32>
    %c0_48 = arith.constant 0 : index
    %c0_49 = arith.constant 0 : index
    %80 = vector.load %arg10[%c0_48, %c0_49] : memref<1x1xf32, #tpu.memory_space<vmem>>, vector<1x1xf32>
    %81 = vector.broadcast %80 : vector<1x1xf32> to vector<1x16xf32>
    %82 = arith.addf %79, %81 : vector<1x16xf32>
    %c0_50 = arith.constant 0 : index
    %c0_51 = arith.constant 0 : index
    %83 = vector.load %arg11[%c0_50, %c0_51] : memref<1x16xf32, #tpu.memory_space<vmem>>, vector<1x16xf32>
    tpu.vector_store %arg11[%c0_50, %c0_51], %82 {strides = array<i32>} : memref<1x16xf32, #tpu.memory_space<vmem>>, vector<1x16xf32>,
    return
  }
  func.func @transform_0(%arg0: i32) -> (i32, i32, i32) {
    %c0_i32 = arith.constant 0 : i32
    %c0_i32_0 = arith.constant 0 : i32
    %c0_i32_1 = arith.constant 0 : i32
    return %c0_i32, %arg0, %c0_i32_0 : i32, i32, i32
  }
  func.func @transform_1(%arg0: i32) -> (i32, i32) {
    %c0_i32 = arith.constant 0 : i32
    %c0_i32_0 = arith.constant 0 : i32
    %c0_i32_1 = arith.constant 0 : i32
    return %c0_i32, %c0_i32_0 : i32, i32
  }
  func.func @transform_2(%arg0: i32) -> (i32, i32) {
    %c0_i32 = arith.constant 0 : i32
    %c0_i32_0 = arith.constant 0 : i32
    %c0_i32_1 = arith.constant 0 : i32
    return %c0_i32, %c0_i32_0 : i32, i32
  }
  func.func @transform_3(%arg0: i32) -> (i32, i32, i32) {
    %c0_i32 = arith.constant 0 : i32
    %c0_i32_0 = arith.constant 0 : i32
    %c0_i32_1 = arith.constant 0 : i32
    %c0_i32_2 = arith.constant 0 : i32
    return %c0_i32, %c0_i32_0, %c0_i32_1 : i32, i32, i32
  }
  func.func @transform_4(%arg0: i32) -> (i32, i32, i32) {
    %c0_i32 = arith.constant 0 : i32
    %c0_i32_0 = arith.constant 0 : i32
    %c0_i32_1 = arith.constant 0 : i32
    %c0_i32_2 = arith.constant 0 : i32
    return %c0_i32, %c0_i32_0, %c0_i32_1 : i32, i32, i32
  }
  func.func @transform_5(%arg0: i32) -> (i32, i32) {
    %c0_i32 = arith.constant 0 : i32
    %c0_i32_0 = arith.constant 0 : i32
    %c0_i32_1 = arith.constant 0 : i32
    return %c0_i32, %c0_i32_0 : i32, i32
  }
  func.func @transform_6(%arg0: i32) -> (i32, i32, i32) {
    %c0_i32 = arith.constant 0 : i32
    %c0_i32_0 = arith.constant 0 : i32
    %c0_i32_1 = arith.constant 0 : i32
    %c0_i32_2 = arith.constant 0 : i32
    return %c0_i32, %c0_i32_0, %c0_i32_1 : i32, i32, i32
  }
  func.func @transform_7(%arg0: i32) -> (i32, i32) {
    %c0_i32 = arith.constant 0 : i32
    %c0_i32_0 = arith.constant 0 : i32
    %c0_i32_1 = arith.constant 0 : i32
    return %c0_i32, %c0_i32_0 : i32, i32
  }
  func.func @transform_8(%arg0: i32) -> (i32, i32) {
    %c0_i32 = arith.constant 0 : i32
    %c0_i32_0 = arith.constant 0 : i32
    %c0_i32_1 = arith.constant 0 : i32
    return %c0_i32, %c0_i32_0 : i32, i32
  }
  func.func @transform_9(%arg0: i32) -> (i32, i32) {
    %c0_i32 = arith.constant 0 : i32
    %c0_i32_0 = arith.constant 0 : i32
    %c0_i32_1 = arith.constant 0 : i32
    return %c0_i32, %c0_i32_0 : i32, i32
  }
  func.func @transform_10(%arg0: i32) -> (i32, i32) {
    %c0_i32 = arith.constant 0 : i32
    %c0_i32_0 = arith.constant 0 : i32
    return %c0_i32, %arg0 : i32, i32
  }
}

</mosaic_0001>

<llo_original>
// kernel: neural_network_dropout.2
$region0: #{neural_network_dropout.2}
  #allocation0 [shape = 'u32[]', space=smem, size = 0x4, offset = 0x4, fixed_abs, tag = 'smem constant byte address 0x4 - core index']
  #allocation1 [shape = 'u32[144,128]{1,0:T(1,128)}', space=vmem, size = 0x12000, scoped, tag = 'internal scratch']
  #allocation2 [shape = 'f32[1,1]{1,0:T(1,128)S(1)}', space=vmem, size = 0x200, scoped, tag = 'scoped memory for neural_network_dropout.2']
  %s0 = inlined_call_operand.vmem [shape: f32[398,32], index: 0, kind: input, shape index: {}]
  %s1 = inlined_call_operand.vmem [shape: f32[1,32], index: 1, kind: input, shape index: {}]
  %s2 = inlined_call_operand.vmem [shape: f32[2,128,32], index: 2, kind: input, shape index: {}]
  %s3 = inlined_call_operand.vmem [shape: f32[2,32,32], index: 3, kind: input, shape index: {}]
  %s4 = inlined_call_operand.vmem [shape: f32[1,32], index: 4, kind: input, shape index: {}]
  %s5 = inlined_call_operand.vmem [shape: f32[5,32,32], index: 5, kind: input, shape index: {}]
  %s6 = inlined_call_operand.vmem [shape: f32[1,32], index: 6, kind: input, shape index: {}]
  %s7 = inlined_call_operand.vmem [shape: f32[1,32], index: 7, kind: input, shape index: {}]
  %s8 = inlined_call_operand.<no memory space> [shape: f32[1,1], index: 8, kind: input, shape index: {}]
  %s9 = inlined_call_operand.vmem [shape: f32[16,10,398], index: 9, kind: input, shape index: {}]
  %s10 = inlined_call_operand.hbm [shape: f32[1,16], index: 10, kind: output, shape index: {}]
  %s11 = sld [smem:[#allocation0]]
  $region50: #{neural_network_dropout.2} parent=0
    _
  %s13 = ssub.s32 1, %s11
  %s14 = scalar_select 0, %s13, %s11
  %v15 = vstv %s8
  %16 = vst [vmem:[#allocation2] sm:$0x1] %v15
  $region1: #{neural_network_dropout.2} parent=0
    #allocation3 [shape = 'u8[512]{0}', space=vmem, size = 0x400, scoped, tag = 'output window, operand 0, single buffered']
    #allocation4 [shape = 's32[1]{0}', space=sflag, size = 0x4, scoped, tag = 'scoped memory for neural_network_dropout.2']
    #allocation5 [shape = 'u8[327680]{0}', space=vmem, size = 0x50000, dematerialized = true, scoped, tag = 'FusionAdapter Buffer %fusion.1 = f32[10,16,398]{2,1,0:T(8,128)} fusion(%param_9.1), kind=kLoop, calls=%fused_computation.1.clone, metadata={op_name="jit(neural_network_dropout)/transpose" stack_frame_id=7}']
    %17 = vsyncpa [#allocation4], 0
    // Predicated region
    $region2: #{neural_network_dropout.2} parent=1 // pred_check
      _
    $region3: #{neural_network_dropout.2} parent=1 // pred_check_branch
      %19 = sbr.rel (0) target = $region5
    $region4: #{neural_network_dropout.2} parent=1 // pred_region
      _
    $region5: #{neural_network_dropout.2} parent=1 // pred_fallthru
      _
    // Predicated region
    $region6: #{neural_network_dropout.2} parent=1 // pred_check
      _
    $region7: #{neural_network_dropout.2} parent=1 // pred_check_branch
      %21 = sbr.rel (0) target = $region9
    $region8: #{neural_network_dropout.2} parent=1 // pred_region
      _
    $region9: #{neural_network_dropout.2} parent=1 // pred_fallthru
      _
    // Predicated region
    $region10: #{neural_network_dropout.2} parent=1 // pred_check
      _
    $region11: #{neural_network_dropout.2} parent=1 // pred_check_branch
      %23 = sbr.rel (0) target = $region13
    $region12: #{neural_network_dropout.2} parent=1 // pred_region
      _
    $region13: #{neural_network_dropout.2} parent=1 // pred_fallthru
      _
    // Predicated region
    $region14: #{neural_network_dropout.2} parent=1 // pred_check
      _
    $region15: #{neural_network_dropout.2} parent=1 // pred_check_branch
      %25 = sbr.rel (0) target = $region17
    $region16: #{neural_network_dropout.2} parent=1 // pred_region
      _
    $region17: #{neural_network_dropout.2} parent=1 // pred_fallthru
      _
    // Predicated region
    $region18: #{neural_network_dropout.2} parent=1 // pred_check
      _
    $region19: #{neural_network_dropout.2} parent=1 // pred_check_branch
      %27 = sbr.rel (0) target = $region21
    $region20: #{neural_network_dropout.2} parent=1 // pred_region
      _
    $region21: #{neural_network_dropout.2} parent=1 // pred_fallthru
      _
    // Predicated region
    $region22: #{neural_network_dropout.2} parent=1 // pred_check
      _
    $region23: #{neural_network_dropout.2} parent=1 // pred_check_branch
      %29 = sbr.rel (0) target = $region25
    $region24: #{neural_network_dropout.2} parent=1 // pred_region
      _
    $region25: #{neural_network_dropout.2} parent=1 // pred_fallthru
      _
    // Predicated region
    $region26: #{neural_network_dropout.2} parent=1 // pred_check
      _
    $region27: #{neural_network_dropout.2} parent=1 // pred_check_branch
      %31 = sbr.rel (0) target = $region29
    $region28: #{neural_network_dropout.2} parent=1 // pred_region
      _
    $region29: #{neural_network_dropout.2} parent=1 // pred_fallthru
      _
    // Predicated region
    $region30: #{neural_network_dropout.2} parent=1 // pred_check
      _
    $region31: #{neural_network_dropout.2} parent=1 // pred_check_branch
      %33 = sbr.rel (0) target = $region33
    $region32: #{neural_network_dropout.2} parent=1 // pred_region
      _
    $region33: #{neural_network_dropout.2} parent=1 // pred_fallthru
      _
    // Predicated region
    $region34: #{neural_network_dropout.2} parent=1 // pred_check
      _
    $region35: #{neural_network_dropout.2} parent=1 // pred_check_branch
      %35 = sbr.rel (0) target = $region37
    $region36: #{neural_network_dropout.2} parent=1 // pred_region
      _
    $region37: #{neural_network_dropout.2} parent=1 // pred_fallthru
      _
    // Predicated region
    $region38: #{neural_network_dropout.2} parent=1 // pred_check
      _
    $region39: #{neural_network_dropout.2} parent=1 // pred_check_branch
      %37 = sbr.rel (0) target = $region41
    $region40: #{neural_network_dropout.2} parent=1 // pred_region
      _
    $region41: #{neural_network_dropout.2} parent=1 // pred_fallthru
      _
    %v38 = vld [vmem:[%s9] sm:$0xff]
    %40 = vst [vmem:[#allocation5] sm:$0xff] %v38
    %s41 = scalar_lea.vmem %s9, 8
    %v42 = vld [vmem:[%s41] sm:$0xff]
    %s43 = scalar_lea.vmem [#allocation5], 8
    %45 = vst [vmem:[%s43] sm:$0xff] %v42
    %s46 = scalar_lea.vmem %s9, 16
    %v47 = vld [vmem:[%s46] sm:$0xff]
    %s48 = scalar_lea.vmem [#allocation5], 16
    %50 = vst [vmem:[%s48] sm:$0xff] %v47
    %s51 = scalar_lea.vmem %s9, 24
    %v52 = vld [vmem:[%s51] sm:$0xff]
    %s53 = scalar_lea.vmem [#allocation5], 24
    %55 = vst [vmem:[%s53] sm:$0xff] %v52
    %s56 = scalar_lea.vmem %s9, 32
    %v57 = vld [vmem:[%s56] sm:$0xff]
    %s58 = scalar_lea.vmem [#allocation5], 32
    %60 = vst [vmem:[%s58] sm:$0xff] %v57
    %s61 = scalar_lea.vmem %s9, 40
    %v62 = vld [vmem:[%s61] sm:$0xff]
    %s63 = scalar_lea.vmem [#allocation5], 40
    %65 = vst [vmem:[%s63] sm:$0xff] %v62
    %s66 = scalar_lea.vmem %s9, 48
    %v67 = vld [vmem:[%s66] sm:$0xff]
    %s68 = scalar_lea.vmem [#allocation5], 48
    %70 = vst [vmem:[%s68] sm:$0xff] %v67
    %s71 = scalar_lea.vmem %s9, 56
    %v72 = vld [vmem:[%s71] sm:$0xff]
    %s73 = scalar_lea.vmem [#allocation5], 56
    %75 = vst [vmem:[%s73] sm:$0xff] %v72
    %s76 = scalar_lea.vmem %s9, 64
    %v77 = vld [vmem:[%s76] sm:$0xff]
    %s78 = scalar_lea.vmem [#allocation5], 64
    %80 = vst [vmem:[%s78] sm:$0xff] %v77
    %s81 = scalar_lea.vmem %s9, 72
    %v82 = vld [vmem:[%s81] sm:$0xff]
    %s83 = scalar_lea.vmem [#allocation5], 72
    %85 = vst [vmem:[%s83] sm:$0xff] %v82
    %s86 = scalar_lea.vmem %s9, 80
    %v87 = vld [vmem:[%s86] sm:$0xff]
    %s88 = scalar_lea.vmem [#allocation5], 80
    %90 = vst [vmem:[%s88] sm:$0xff] %v87
    %s91 = scalar_lea.vmem %s9, 88
    %v92 = vld [vmem:[%s91] sm:$0xff]
    %s93 = scalar_lea.vmem [#allocation5], 88
    %95 = vst [vmem:[%s93] sm:$0xff] %v92
    %s96 = scalar_lea.vmem %s9, 96
    %v97 = vld [vmem:[%s96] sm:$0xff]
    %s98 = scalar_lea.vmem [#allocation5], 96
    %100 = vst [vmem:[%s98] sm:$0xff] %v97
    %s101 = scalar_lea.vmem %s9, 104
    %v102 = vld [vmem:[%s101] sm:$0xff]
    %s103 = scalar_lea.vmem [#allocation5], 104
    %105 = vst [vmem:[%s103] sm:$0xff] %v102
    %s106 = scalar_lea.vmem %s9, 112
    %v107 = vld [vmem:[%s106] sm:$0xff]
    %s108 = scalar_lea.vmem [#allocation5], 112
    %110 = vst [vmem:[%s108] sm:$0xff] %v107
    %s111 = scalar_lea.vmem %s9, 120
    %v112 = vld [vmem:[%s111] sm:$0xff]
    %s113 = scalar_lea.vmem [#allocation5], 120
    %115 = vst [vmem:[%s113] sm:$0xff] %v112
    %s116 = scalar_lea.vmem %s9, 128
    %v117 = vld [vmem:[%s116] sm:$0xff]
    %s118 = scalar_lea.vmem [#allocation5], 128
    %120 = vst [vmem:[%s118] sm:$0xff] %v117
    %s121 = scalar_lea.vmem %s9, 136
    %v122 = vld [vmem:[%s121] sm:$0xff]
    %s123 = scalar_lea.vmem [#allocation5], 136
    %125 = vst [vmem:[%s123] sm:$0xff] %v122
    %s126 = scalar_lea.vmem %s9, 144
    %v127 = vld [vmem:[%s126] sm:$0xff]
    %s128 = scalar_lea.vmem [#allocation5], 144
    %130 = vst [vmem:[%s128] sm:$0xff] %v127
    %s131 = scalar_lea.vmem %s9, 152
    %v132 = vld [vmem:[%s131] sm:$0xff]
    %s133 = scalar_lea.vmem [#allocation5], 152
    %135 = vst [vmem:[%s133] sm:$0xff] %v132
    %s136 = scalar_lea.vmem %s9, 160
    %v137 = vld [vmem:[%s136] sm:$0xff]
    %s138 = scalar_lea.vmem [#allocation5], 160
    %140 = vst [vmem:[%s138] sm:$0xff] %v137
    %s141 = scalar_lea.vmem %s9, 168
    %v142 = vld [vmem:[%s141] sm:$0xff]
    %s143 = scalar_lea.vmem [#allocation5], 168
    %145 = vst [vmem:[%s143] sm:$0xff] %v142
    %s146 = scalar_lea.vmem %s9, 176
    %v147 = vld [vmem:[%s146] sm:$0xff]
    %s148 = scalar_lea.vmem [#allocation5], 176
    %150 = vst [vmem:[%s148] sm:$0xff] %v147
    %s151 = scalar_lea.vmem %s9, 184
    %v152 = vld [vmem:[%s151] sm:$0xff]
    %s153 = scalar_lea.vmem [#allocation5], 184
    %155 = vst [vmem:[%s153] sm:$0xff] %v152
    %s156 = scalar_lea.vmem %s9, 192
    %v157 = vld [vmem:[%s156] sm:$0xff]
    %s158 = scalar_lea.vmem [#allocation5], 192
    %160 = vst [vmem:[%s158] sm:$0xff] %v157
    %s161 = scalar_lea.vmem %s9, 200
    %v162 = vld [vmem:[%s161] sm:$0xff]
    %s163 = scalar_lea.vmem [#allocation5], 200
    %165 = vst [vmem:[%s163] sm:$0xff] %v162
    %s166 = scalar_lea.vmem %s9, 208
    %v167 = vld [vmem:[%s166] sm:$0xff]
    %s168 = scalar_lea.vmem [#allocation5], 208
    %170 = vst [vmem:[%s168] sm:$0xff] %v167
    %s171 = scalar_lea.vmem %s9, 216
    %v172 = vld [vmem:[%s171] sm:$0xff]
    %s173 = scalar_lea.vmem [#allocation5], 216
    %175 = vst [vmem:[%s173] sm:$0xff] %v172
    %s176 = scalar_lea.vmem %s9, 224
    %v177 = vld [vmem:[%s176] sm:$0xff]
    %s178 = scalar_lea.vmem [#allocation5], 224
    %180 = vst [vmem:[%s178] sm:$0xff] %v177
    %s181 = scalar_lea.vmem %s9, 232
    %v182 = vld [vmem:[%s181] sm:$0xff]
    %s183 = scalar_lea.vmem [#allocation5], 232
    %185 = vst [vmem:[%s183] sm:$0xff] %v182
    %s186 = scalar_lea.vmem %s9, 240
    %v187 = vld [vmem:[%s186] sm:$0xff]
    %s188 = scalar_lea.vmem [#allocation5], 240
    %190 = vst [vmem:[%s188] sm:$0xff] %v187
    %s191 = scalar_lea.vmem %s9, 248
    %v192 = vld [vmem:[%s191] sm:$0xff]
    %s193 = scalar_lea.vmem [#allocation5], 248
    %195 = vst [vmem:[%s193] sm:$0xff] %v192
    %s196 = scalar_lea.vmem %s9, 256
    %v197 = vld [vmem:[%s196] sm:$0xff]
    %s198 = scalar_lea.vmem [#allocation5], 256
    %200 = vst [vmem:[%s198] sm:$0xff] %v197
    %s201 = scalar_lea.vmem %s9, 264
    %v202 = vld [vmem:[%s201] sm:$0xff]
    %s203 = scalar_lea.vmem [#allocation5], 264
    %205 = vst [vmem:[%s203] sm:$0xff] %v202
    %s206 = scalar_lea.vmem %s9, 272
    %v207 = vld [vmem:[%s206] sm:$0xff]
    %s208 = scalar_lea.vmem [#allocation5], 272
    %210 = vst [vmem:[%s208] sm:$0xff] %v207
    %s211 = scalar_lea.vmem %s9, 280
    %v212 = vld [vmem:[%s211] sm:$0xff]
    %s213 = scalar_lea.vmem [#allocation5], 280
    %215 = vst [vmem:[%s213] sm:$0xff] %v212
    %s216 = scalar_lea.vmem %s9, 288
    %v217 = vld [vmem:[%s216] sm:$0xff]
    %s218 = scalar_lea.vmem [#allocation5], 288
    %220 = vst [vmem:[%s218] sm:$0xff] %v217
    %s221 = scalar_lea.vmem %s9, 296
    %v222 = vld [vmem:[%s221] sm:$0xff]
    %s223 = scalar_lea.vmem [#allocation5], 296
    %225 = vst [vmem:[%s223] sm:$0xff] %v222
    %s226 = scalar_lea.vmem %s9, 304
    %v227 = vld [vmem:[%s226] sm:$0xff]
    %s228 = scalar_lea.vmem [#allocation5], 304
    %230 = vst [vmem:[%s228] sm:$0xff] %v227
    %s231 = scalar_lea.vmem %s9, 312
    %v232 = vld [vmem:[%s231] sm:$0xff]
    %s233 = scalar_lea.vmem [#allocation5], 312
    %235 = vst [vmem:[%s233] sm:$0xff] %v232
    %s236 = scalar_lea.vmem %s9, 320
    %v237 = vld [vmem:[%s236] sm:$0xff]
    %s238 = scalar_lea.vmem [#allocation5], 320
    %240 = vst [vmem:[%s238] sm:$0xff] %v237
    %s241 = scalar_lea.vmem %s9, 328
    %v242 = vld [vmem:[%s241] sm:$0xff]
    %s243 = scalar_lea.vmem [#allocation5], 328
    %245 = vst [vmem:[%s243] sm:$0xff] %v242
    %s246 = scalar_lea.vmem %s9, 336
    %v247 = vld [vmem:[%s246] sm:$0xff]
    %s248 = scalar_lea.vmem [#allocation5], 336
    %250 = vst [vmem:[%s248] sm:$0xff] %v247
    %s251 = scalar_lea.vmem %s9, 344
    %v252 = vld [vmem:[%s251] sm:$0xff]
    %s253 = scalar_lea.vmem [#allocation5], 344
    %255 = vst [vmem:[%s253] sm:$0xff] %v252
    %s256 = scalar_lea.vmem %s9, 352
    %v257 = vld [vmem:[%s256] sm:$0xff]
    %s258 = scalar_lea.vmem [#allocation5], 352
    %260 = vst [vmem:[%s258] sm:$0xff] %v257
    %s261 = scalar_lea.vmem %s9, 360
    %v262 = vld [vmem:[%s261] sm:$0xff]
    %s263 = scalar_lea.vmem [#allocation5], 360
    %265 = vst [vmem:[%s263] sm:$0xff] %v262
    %s266 = scalar_lea.vmem %s9, 368
    %v267 = vld [vmem:[%s266] sm:$0xff]
    %s268 = scalar_lea.vmem [#allocation5], 368
    %270 = vst [vmem:[%s268] sm:$0xff] %v267
    %s271 = scalar_lea.vmem %s9, 376
    %v272 = vld [vmem:[%s271] sm:$0xff]
    %s273 = scalar_lea.vmem [#allocation5], 376
    %275 = vst [vmem:[%s273] sm:$0xff] %v272
    %s276 = scalar_lea.vmem %s9, 384
    %v277 = vld [vmem:[%s276] sm:$0xff]
    %s278 = scalar_lea.vmem [#allocation5], 384
    %280 = vst [vmem:[%s278] sm:$0xff] %v277
    %s281 = scalar_lea.vmem %s9, 392
    %v282 = vld [vmem:[%s281] sm:$0xff]
    %s283 = scalar_lea.vmem [#allocation5], 392
    %285 = vst [vmem:[%s283] sm:$0xff] %v282
    %s286 = scalar_lea.vmem %s9, 400
    %v287 = vld [vmem:[%s286] sm:$0xff]
    %s288 = scalar_lea.vmem [#allocation5], 400
    %290 = vst [vmem:[%s288] sm:$0xff] %v287
    %s291 = scalar_lea.vmem %s9, 408
    %v292 = vld [vmem:[%s291] sm:$0xff]
    %s293 = scalar_lea.vmem [#allocation5], 408
    %295 = vst [vmem:[%s293] sm:$0xff] %v292
    %s296 = scalar_lea.vmem %s9, 416
    %v297 = vld [vmem:[%s296] sm:$0xff]
    %s298 = scalar_lea.vmem [#allocation5], 416
    %300 = vst [vmem:[%s298] sm:$0xff] %v297
    %s301 = scalar_lea.vmem %s9, 424
    %v302 = vld [vmem:[%s301] sm:$0xff]
    %s303 = scalar_lea.vmem [#allocation5], 424
    %305 = vst [vmem:[%s303] sm:$0xff] %v302
    %s306 = scalar_lea.vmem %s9, 432
    %v307 = vld [vmem:[%s306] sm:$0xff]
    %s308 = scalar_lea.vmem [#allocation5], 432
    %310 = vst [vmem:[%s308] sm:$0xff] %v307
    %s311 = scalar_lea.vmem %s9, 440
    %v312 = vld [vmem:[%s311] sm:$0xff]
    %s313 = scalar_lea.vmem [#allocation5], 440
    %315 = vst [vmem:[%s313] sm:$0xff] %v312
    %s316 = scalar_lea.vmem %s9, 448
    %v317 = vld [vmem:[%s316] sm:$0xff]
    %s318 = scalar_lea.vmem [#allocation5], 448
    %320 = vst [vmem:[%s318] sm:$0xff] %v317
    %s321 = scalar_lea.vmem %s9, 456
    %v322 = vld [vmem:[%s321] sm:$0xff]
    %s323 = scalar_lea.vmem [#allocation5], 456
    %325 = vst [vmem:[%s323] sm:$0xff] %v322
    %s326 = scalar_lea.vmem %s9, 464
    %v327 = vld [vmem:[%s326] sm:$0xff]
    %s328 = scalar_lea.vmem [#allocation5], 464
    %330 = vst [vmem:[%s328] sm:$0xff] %v327
    %s331 = scalar_lea.vmem %s9, 472
    %v332 = vld [vmem:[%s331] sm:$0xff]
    %s333 = scalar_lea.vmem [#allocation5], 472
    %335 = vst [vmem:[%s333] sm:$0xff] %v332
    %s336 = scalar_lea.vmem %s9, 480
    %v337 = vld [vmem:[%s336] sm:$0xff]
    %s338 = scalar_lea.vmem [#allocation5], 480
    %340 = vst [vmem:[%s338] sm:$0xff] %v337
    %s341 = scalar_lea.vmem %s9, 488
    %v342 = vld [vmem:[%s341] sm:$0xff]
    %s343 = scalar_lea.vmem [#allocation5], 488
    %345 = vst [vmem:[%s343] sm:$0xff] %v342
    %s346 = scalar_lea.vmem %s9, 496
    %v347 = vld [vmem:[%s346] sm:$0xff]
    %s348 = scalar_lea.vmem [#allocation5], 496
    %350 = vst [vmem:[%s348] sm:$0xff] %v347
    %s351 = scalar_lea.vmem %s9, 504
    %v352 = vld [vmem:[%s351] sm:$0xff]
    %s353 = scalar_lea.vmem [#allocation5], 504
    %355 = vst [vmem:[%s353] sm:$0xff] %v352
    %s356 = scalar_lea.vmem %s9, 512
    %v357 = vld [vmem:[%s356] sm:$0xff]
    %s358 = scalar_lea.vmem [#allocation5], 512
    %360 = vst [vmem:[%s358] sm:$0xff] %v357
    %s361 = scalar_lea.vmem %s9, 520
    %v362 = vld [vmem:[%s361] sm:$0xff]
    %s363 = scalar_lea.vmem [#allocation5], 520
    %365 = vst [vmem:[%s363] sm:$0xff] %v362
    %s366 = scalar_lea.vmem %s9, 528
    %v367 = vld [vmem:[%s366] sm:$0xff]
    %s368 = scalar_lea.vmem [#allocation5], 528
    %370 = vst [vmem:[%s368] sm:$0xff] %v367
    %s371 = scalar_lea.vmem %s9, 536
    %v372 = vld [vmem:[%s371] sm:$0xff]
    %s373 = scalar_lea.vmem [#allocation5], 536
    %375 = vst [vmem:[%s373] sm:$0xff] %v372
    %s376 = scalar_lea.vmem %s9, 544
    %v377 = vld [vmem:[%s376] sm:$0xff]
    %s378 = scalar_lea.vmem [#allocation5], 544
    %380 = vst [vmem:[%s378] sm:$0xff] %v377
    %s381 = scalar_lea.vmem %s9, 552
    %v382 = vld [vmem:[%s381] sm:$0xff]
    %s383 = scalar_lea.vmem [#allocation5], 552
    %385 = vst [vmem:[%s383] sm:$0xff] %v382
    %s386 = scalar_lea.vmem %s9, 560
    %v387 = vld [vmem:[%s386] sm:$0xff]
    %s388 = scalar_lea.vmem [#allocation5], 560
    %390 = vst [vmem:[%s388] sm:$0xff] %v387
    %s391 = scalar_lea.vmem %s9, 568
    %v392 = vld [vmem:[%s391] sm:$0xff]
    %s393 = scalar_lea.vmem [#allocation5], 568
    %395 = vst [vmem:[%s393] sm:$0xff] %v392
    %s396 = scalar_lea.vmem %s9, 576
    %v397 = vld [vmem:[%s396] sm:$0xff]
    %s398 = scalar_lea.vmem [#allocation5], 576
    %400 = vst [vmem:[%s398] sm:$0xff] %v397
    %s401 = scalar_lea.vmem %s9, 584
    %v402 = vld [vmem:[%s401] sm:$0xff]
    %s403 = scalar_lea.vmem [#allocation5], 584
    %405 = vst [vmem:[%s403] sm:$0xff] %v402
    %s406 = scalar_lea.vmem %s9, 592
    %v407 = vld [vmem:[%s406] sm:$0xff]
    %s408 = scalar_lea.vmem [#allocation5], 592
    %410 = vst [vmem:[%s408] sm:$0xff] %v407
    %s411 = scalar_lea.vmem %s9, 600
    %v412 = vld [vmem:[%s411] sm:$0xff]
    %s413 = scalar_lea.vmem [#allocation5], 600
    %415 = vst [vmem:[%s413] sm:$0xff] %v412
    %s416 = scalar_lea.vmem %s9, 608
    %v417 = vld [vmem:[%s416] sm:$0xff]
    %s418 = scalar_lea.vmem [#allocation5], 608
    %420 = vst [vmem:[%s418] sm:$0xff] %v417
    %s421 = scalar_lea.vmem %s9, 616
    %v422 = vld [vmem:[%s421] sm:$0xff]
    %s423 = scalar_lea.vmem [#allocation5], 616
    %425 = vst [vmem:[%s423] sm:$0xff] %v422
    %s426 = scalar_lea.vmem %s9, 624
    %v427 = vld [vmem:[%s426] sm:$0xff]
    %s428 = scalar_lea.vmem [#allocation5], 624
    %430 = vst [vmem:[%s428] sm:$0xff] %v427
    %s431 = scalar_lea.vmem %s9, 632
    %v432 = vld [vmem:[%s431] sm:$0xff]
    %s433 = scalar_lea.vmem [#allocation5], 632
    %435 = vst [vmem:[%s433] sm:$0xff] %v432
    %v436 = vld [vmem:[#allocation5] sm:$0xff]
    %v437 = vld [vmem:[#allocation5 + $0x8] sm:$0xff]
    %v438 = vld [vmem:[#allocation5 + $0x10] sm:$0xff]
    %v439 = vld [vmem:[#allocation5 + $0x18] sm:$0xff]
    %v440 = vld [vmem:[#allocation5 + $0x20] sm:$0xff]
    %v441 = vld [vmem:[#allocation5 + $0x28] sm:$0xff]
    %v442 = vld [vmem:[#allocation5 + $0x30] sm:$0xff]
    %v443 = vld [vmem:[#allocation5 + $0x38] sm:$0xff]
    %v444 = vld [vmem:[#allocation5 + $0x40] sm:$0xff]
    %v445 = vld [vmem:[#allocation5 + $0x48] sm:$0xff]
    %v446 = vld [vmem:[#allocation5 + $0x50] sm:$0xff]
    %v447 = vld [vmem:[#allocation5 + $0x58] sm:$0xff]
    %v448 = vld [vmem:[#allocation5 + $0x60] sm:$0xff]
    %v449 = vld [vmem:[#allocation5 + $0x68] sm:$0xff]
    %v450 = vld [vmem:[#allocation5 + $0x70] sm:$0xff]
    %v451 = vld [vmem:[#allocation5 + $0x78] sm:$0xff]
    %v452 = vld [vmem:[#allocation5 + $0x80] sm:$0xff]
    %v453 = vld [vmem:[#allocation5 + $0x88] sm:$0xff]
    %v454 = vld [vmem:[#allocation5 + $0x90] sm:$0xff]
    %v455 = vld [vmem:[#allocation5 + $0x98] sm:$0xff]
    %v456 = vld [vmem:[#allocation5 + $0xa0] sm:$0xff]
    %v457 = vld [vmem:[#allocation5 + $0xa8] sm:$0xff]
    %v458 = vld [vmem:[#allocation5 + $0xb0] sm:$0xff]
    %v459 = vld [vmem:[#allocation5 + $0xb8] sm:$0xff]
    %v460 = vld [vmem:[#allocation5 + $0xc0] sm:$0xff]
    %v461 = vld [vmem:[#allocation5 + $0xc8] sm:$0xff]
    %v462 = vld [vmem:[#allocation5 + $0xd0] sm:$0xff]
    %v463 = vld [vmem:[#allocation5 + $0xd8] sm:$0xff]
    %v464 = vld [vmem:[#allocation5 + $0xe0] sm:$0xff]
    %v465 = vld [vmem:[#allocation5 + $0xe8] sm:$0xff]
    %v466 = vld [vmem:[#allocation5 + $0xf0] sm:$0xff]
    %v467 = vld [vmem:[#allocation5 + $0xf8] sm:$0xff]
    %v468 = vld [vmem:[#allocation5 + $0x100] sm:$0xff]
    %v469 = vld [vmem:[#allocation5 + $0x108] sm:$0xff]
    %v470 = vld [vmem:[#allocation5 + $0x110] sm:$0xff]
    %v471 = vld [vmem:[#allocation5 + $0x118] sm:$0xff]
    %v472 = vld [vmem:[#allocation5 + $0x120] sm:$0xff]
    %v473 = vld [vmem:[#allocation5 + $0x128] sm:$0xff]
    %v474 = vld [vmem:[#allocation5 + $0x130] sm:$0xff]
    %v475 = vld [vmem:[#allocation5 + $0x138] sm:$0xff]
    %v476 = vld [vmem:[#allocation5 + $0x140] sm:$0xff]
    %v477 = vld [vmem:[#allocation5 + $0x148] sm:$0xff]
    %v478 = vld [vmem:[#allocation5 + $0x150] sm:$0xff]
    %v479 = vld [vmem:[#allocation5 + $0x158] sm:$0xff]
    %v480 = vld [vmem:[#allocation5 + $0x160] sm:$0xff]
    %v481 = vld [vmem:[#allocation5 + $0x168] sm:$0xff]
    %v482 = vld [vmem:[#allocation5 + $0x170] sm:$0xff]
    %v483 = vld [vmem:[#allocation5 + $0x178] sm:$0xff]
    %v484 = vld [vmem:[#allocation5 + $0x180] sm:$0xff]
    %v485 = vld [vmem:[#allocation5 + $0x188] sm:$0xff]
    %v486 = vld [vmem:[#allocation5 + $0x190] sm:$0xff]
    %v487 = vld [vmem:[#allocation5 + $0x198] sm:$0xff]
    %v488 = vld [vmem:[#allocation5 + $0x1a0] sm:$0xff]
    %v489 = vld [vmem:[#allocation5 + $0x1a8] sm:$0xff]
    %v490 = vld [vmem:[#allocation5 + $0x1b0] sm:$0xff]
    %v491 = vld [vmem:[#allocation5 + $0x1b8] sm:$0xff]
    %v492 = vld [vmem:[#allocation5 + $0x1c0] sm:$0xff]
    %v493 = vld [vmem:[#allocation5 + $0x1c8] sm:$0xff]
    %v494 = vld [vmem:[#allocation5 + $0x1d0] sm:$0xff]
    %v495 = vld [vmem:[#allocation5 + $0x1d8] sm:$0xff]
    %v496 = vld [vmem:[#allocation5 + $0x1e0] sm:$0xff]
    %v497 = vld [vmem:[#allocation5 + $0x1e8] sm:$0xff]
    %v498 = vld [vmem:[#allocation5 + $0x1f0] sm:$0xff]
    %v499 = vld [vmem:[#allocation5 + $0x1f8] sm:$0xff]
    %v500 = vld [vmem:[#allocation5 + $0x200] sm:$0xff]
    %v501 = vld [vmem:[#allocation5 + $0x208] sm:$0xff]
    %v502 = vld [vmem:[#allocation5 + $0x210] sm:$0xff]
    %v503 = vld [vmem:[#allocation5 + $0x218] sm:$0xff]
    %v504 = vld [vmem:[#allocation5 + $0x220] sm:$0xff]
    %v505 = vld [vmem:[#allocation5 + $0x228] sm:$0xff]
    %v506 = vld [vmem:[#allocation5 + $0x230] sm:$0xff]
    %v507 = vld [vmem:[#allocation5 + $0x238] sm:$0xff]
    %v508 = vld [vmem:[#allocation5 + $0x240] sm:$0xff]
    %v509 = vld [vmem:[#allocation5 + $0x248] sm:$0xff]
    %v510 = vld [vmem:[#allocation5 + $0x250] sm:$0xff]
    %v511 = vld [vmem:[#allocation5 + $0x258] sm:$0xff]
    %v512 = vld [vmem:[#allocation5 + $0x260] sm:$0xff]
    %v513 = vld [vmem:[#allocation5 + $0x268] sm:$0xff]
    %v514 = vld [vmem:[#allocation5 + $0x270] sm:$0xff]
    %v515 = vld [vmem:[#allocation5 + $0x278] sm:$0xff]
    %v516 = vld [vmem:[%s0] sm:$0xff]
    %v517 = vld [vmem:[%s0 + $0x8] sm:$0xff]
    %v518 = vld [vmem:[%s0 + $0x10] sm:$0xff]
    %v519 = vld [vmem:[%s0 + $0x18] sm:$0xff]
    %v520 = vld [vmem:[%s0 + $0x20] sm:$0xff]
    %v521 = vld [vmem:[%s0 + $0x28] sm:$0xff]
    %v522 = vld [vmem:[%s0 + $0x30] sm:$0xff]
    %v523 = vld [vmem:[%s0 + $0x38] sm:$0xff]
    %v524 = vld [vmem:[%s0 + $0x40] sm:$0xff]
    %v525 = vld [vmem:[%s0 + $0x48] sm:$0xff]
    %v526 = vld [vmem:[%s0 + $0x50] sm:$0xff]
    %v527 = vld [vmem:[%s0 + $0x58] sm:$0xff]
    %v528 = vld [vmem:[%s0 + $0x60] sm:$0xff]
    %v529 = vld [vmem:[%s0 + $0x68] sm:$0xff]
    %v530 = vld [vmem:[%s0 + $0x70] sm:$0xff]
    %v531 = vld [vmem:[%s0 + $0x78] sm:$0xff]
    %v532 = vld [vmem:[%s0 + $0x80] sm:$0xff]
    %v533 = vld [vmem:[%s0 + $0x88] sm:$0xff]
    %v534 = vld [vmem:[%s0 + $0x90] sm:$0xff]
    %v535 = vld [vmem:[%s0 + $0x98] sm:$0xff]
    %v536 = vld [vmem:[%s0 + $0xa0] sm:$0xff]
    %v537 = vld [vmem:[%s0 + $0xa8] sm:$0xff]
    %v538 = vld [vmem:[%s0 + $0xb0] sm:$0xff]
    %v539 = vld [vmem:[%s0 + $0xb8] sm:$0xff]
    %v540 = vld [vmem:[%s0 + $0xc0] sm:$0xff]
    %v541 = vld [vmem:[%s0 + $0xc8] sm:$0xff]
    %v542 = vld [vmem:[%s0 + $0xd0] sm:$0xff]
    %v543 = vld [vmem:[%s0 + $0xd8] sm:$0xff]
    %v544 = vld [vmem:[%s0 + $0xe0] sm:$0xff]
    %v545 = vld [vmem:[%s0 + $0xe8] sm:$0xff]
    %v546 = vld [vmem:[%s0 + $0xf0] sm:$0xff]
    %v547 = vld [vmem:[%s0 + $0xf8] sm:$0xff]
    %v548 = vld [vmem:[%s0 + $0x100] sm:$0xff]
    %v549 = vld [vmem:[%s0 + $0x108] sm:$0xff]
    %v550 = vld [vmem:[%s0 + $0x110] sm:$0xff]
    %v551 = vld [vmem:[%s0 + $0x118] sm:$0xff]
    %v552 = vld [vmem:[%s0 + $0x120] sm:$0xff]
    %v553 = vld [vmem:[%s0 + $0x128] sm:$0xff]
    %v554 = vld [vmem:[%s0 + $0x130] sm:$0xff]
    %v555 = vld [vmem:[%s0 + $0x138] sm:$0xff]
    %v556 = vld [vmem:[%s0 + $0x140] sm:$0xff]
    %v557 = vld [vmem:[%s0 + $0x148] sm:$0xff]
    %v558 = vld [vmem:[%s0 + $0x150] sm:$0xff]
    %v559 = vld [vmem:[%s0 + $0x158] sm:$0xff]
    %v560 = vld [vmem:[%s0 + $0x160] sm:$0xff]
    %v561 = vld [vmem:[%s0 + $0x168] sm:$0xff]
    %v562 = vld [vmem:[%s0 + $0x170] sm:$0xff]
    %v563 = vld [vmem:[%s0 + $0x178] sm:$0xff]
    %v564 = vld [vmem:[%s0 + $0x180] sm:$0xff]
    %v565 = vld [vmem:[%s0 + $0x188] sm:$0x3f]
    %v566 = vld [vmem:[%s1] sm:$0x1]
    %v568 = vlaneseq
    %v569 = vshrl.u32 %v568, 7
    %v570 = vsub.s32 0, %v569
    %v571 = vrot.slane %v566, %v570
    %vm573 = vcmask 113664
    %v575 = vsel %vm573, %v439, 0
    %v578 = vsel %vm573, %v443, 0
    %v581 = vsel %vm573, %v447, 0
    %v584 = vsel %vm573, %v451, 0
    %v587 = vsel %vm573, %v455, 0
    %v590 = vsel %vm573, %v459, 0
    %v593 = vsel %vm573, %v463, 0
    %v596 = vsel %vm573, %v467, 0
    %v599 = vsel %vm573, %v471, 0
    %v602 = vsel %vm573, %v475, 0
    %v605 = vsel %vm573, %v479, 0
    %v608 = vsel %vm573, %v483, 0
    %v611 = vsel %vm573, %v487, 0
    %v614 = vsel %vm573, %v491, 0
    %v617 = vsel %vm573, %v495, 0
    %v620 = vsel %vm573, %v499, 0
    %v623 = vsel %vm573, %v503, 0
    %v626 = vsel %vm573, %v507, 0
    %v629 = vsel %vm573, %v511, 0
    %v632 = vsel %vm573, %v515, 0
    %vm634 = vcmask 1045504
    %v636 = vsel %vm634, %v565, 0
    %638 = vmatprep.subr.mxu0 0.0
    %639 = vmatpush1.msra.mxu0 %v516
    %640 = vmatprep.subr.mxu0 0.0
    %641 = vmatpush1.msra.mxu0 %v517
    %642 = vmatprep.subr.mxu0 0.0
    %643 = vmatpush1.msra.mxu0 %v518
    %644 = vmatprep.subr.mxu0 0.0
    %645 = vmatpush1.msra.mxu0 %v519
    %646 = vmatprep.subr.mxu0 0.0
    %647 = vmatpush1.msra.mxu0 %v520
    %648 = vmatprep.subr.mxu0 0.0
    %649 = vmatpush1.msra.mxu0 %v521
    %650 = vmatprep.subr.mxu0 0.0
    %651 = vmatpush1.msra.mxu0 %v522
    %652 = vmatprep.subr.mxu0 0.0
    %653 = vmatpush1.msra.mxu0 %v523
    %654 = vmatprep.subr.mxu0 0.0
    %655 = vmatpush1.msra.mxu0 %v524
    %656 = vmatprep.subr.mxu0 0.0
    %657 = vmatpush1.msra.mxu0 %v525
    %658 = vmatprep.subr.mxu0 0.0
    %659 = vmatpush1.msra.mxu0 %v526
    %660 = vmatprep.subr.mxu0 0.0
    %661 = vmatpush1.msra.mxu0 %v527
    %662 = vmatprep.subr.mxu0 0.0
    %663 = vmatpush1.msra.mxu0 %v528
    %664 = vmatprep.subr.mxu0 0.0
    %665 = vmatpush1.msra.mxu0 %v529
    %666 = vmatprep.subr.mxu0 0.0
    %667 = vmatpush1.msra.mxu0 %v530
    %668 = vmatprep.subr.mxu0 0.0
    %669 = vmatpush1.msra.mxu0 %v531
    %670 = vmatprep.subr.mxu0 0.0
    %671 = vmatpush1.msra.mxu0 %v532
    %672 = vmatprep.subr.mxu0 0.0
    %673 = vmatpush1.msra.mxu0 %v533
    %674 = vmatprep.subr.mxu0 0.0
    %675 = vmatpush1.msra.mxu0 %v534
    %676 = vmatprep.subr.mxu0 0.0
    %677 = vmatpush1.msra.mxu0 %v535
    %678 = vmatprep.subr.mxu0 0.0
    %679 = vmatpush1.msra.mxu0 %v536
    %680 = vmatprep.subr.mxu0 0.0
    %681 = vmatpush1.msra.mxu0 %v537
    %682 = vmatprep.subr.mxu0 0.0
    %683 = vmatpush1.msra.mxu0 %v538
    %684 = vmatprep.subr.mxu0 0.0
    %685 = vmatpush1.msra.mxu0 %v539
    %686 = vmatprep.subr.mxu0 0.0
    %687 = vmatpush1.msra.mxu0 %v540
    %688 = vmatprep.subr.mxu0 0.0
    %689 = vmatpush1.msra.mxu0 %v541
    %690 = vmatprep.subr.mxu0 0.0
    %691 = vmatpush1.msra.mxu0 %v542
    %692 = vmatprep.subr.mxu0 0.0
    %693 = vmatpush1.msra.mxu0 %v543
    %694 = vmatprep.subr.mxu0 0.0
    %695 = vmatpush1.msra.mxu0 %v544
    %696 = vmatprep.subr.mxu0 0.0
    %697 = vmatpush1.msra.mxu0 %v545
    %698 = vmatprep.subr.mxu0 0.0
    %699 = vmatpush1.msra.mxu0 %v546
    %700 = vmatprep.subr.mxu0 0.0
    %701 = vmatpush1.msra.mxu0 %v547
    %702 = vmatprep.mubr.f32.mxu0 %v437
    %703 = vmatmul.mubr.f32.gmra.mrb[0].mxu0 %v436
    %v704 = vpop.f32.mrb[0].mxu0
    %v705 = vadd.f32 %v571, %v704
    %v706 = vpop.f32.mrb[0].mxu0
    %707 = vmatprep.mubr.f32.mxu0 %v441
    %708 = vmatmul.mubr.f32.gmra.mrb[0].mxu0 %v440
    %v709 = vpop.f32.mrb[0].mxu0
    %v710 = vadd.f32 %v571, %v709
    %v711 = vpop.f32.mrb[0].mxu0
    %712 = vmatprep.mubr.f32.mxu0 %v445
    %713 = vmatmul.mubr.f32.gmra.mrb[0].mxu0 %v444
    %v714 = vpop.f32.mrb[0].mxu0
    %v715 = vadd.f32 %v571, %v714
    %v716 = vpop.f32.mrb[0].mxu0
    %717 = vmatprep.mubr.f32.mxu0 %v449
    %718 = vmatmul.mubr.f32.gmra.mrb[0].mxu0 %v448
    %v719 = vpop.f32.mrb[0].mxu0
    %v720 = vadd.f32 %v571, %v719
    %v721 = vpop.f32.mrb[0].mxu0
    %722 = vmatprep.mubr.f32.mxu0 %v453
    %723 = vmatmul.mubr.f32.gmra.mrb[0].mxu0 %v452
    %v724 = vpop.f32.mrb[0].mxu0
    %v725 = vadd.f32 %v571, %v724
    %v726 = vpop.f32.mrb[0].mxu0
    %727 = vmatprep.mubr.f32.mxu0 %v457
    %728 = vmatmul.mubr.f32.gmra.mrb[0].mxu0 %v456
    %v729 = vpop.f32.mrb[0].mxu0
    %v730 = vadd.f32 %v571, %v729
    %v731 = vpop.f32.mrb[0].mxu0
    %732 = vmatprep.mubr.f32.mxu0 %v461
    %733 = vmatmul.mubr.f32.gmra.mrb[0].mxu0 %v460
    %v734 = vpop.f32.mrb[0].mxu0
    %v735 = vadd.f32 %v571, %v734
    %v736 = vpop.f32.mrb[0].mxu0
    %737 = vmatprep.mubr.f32.mxu0 %v465
    %738 = vmatmul.mubr.f32.gmra.mrb[0].mxu0 %v464
    %v739 = vpop.f32.mrb[0].mxu0
    %v740 = vadd.f32 %v571, %v739
    %v741 = vpop.f32.mrb[0].mxu0
    %742 = vmatprep.mubr.f32.mxu0 %v469
    %743 = vmatmul.mubr.f32.gmra.mrb[0].mxu0 %v468
    %v744 = vpop.f32.mrb[0].mxu0
    %v745 = vadd.f32 %v571, %v744
    %v746 = vpop.f32.mrb[0].mxu0
    %747 = vmatprep.mubr.f32.mxu0 %v473
    %748 = vmatmul.mubr.f32.gmra.mrb[0].mxu0 %v472
    %v749 = vpop.f32.mrb[0].mxu0
    %v750 = vadd.f32 %v571, %v749
    %v751 = vpop.f32.mrb[0].mxu0
    %752 = vmatprep.mubr.f32.mxu0 %v477
    %753 = vmatmul.mubr.f32.gmra.mrb[0].mxu0 %v476
    %v754 = vpop.f32.mrb[0].mxu0
    %v755 = vadd.f32 %v571, %v754
    %v756 = vpop.f32.mrb[0].mxu0
    %757 = vmatprep.mubr.f32.mxu0 %v481
    %758 = vmatmul.mubr.f32.gmra.mrb[0].mxu0 %v480
    %v759 = vpop.f32.mrb[0].mxu0
    %v760 = vadd.f32 %v571, %v759
    %v761 = vpop.f32.mrb[0].mxu0
    %762 = vmatprep.mubr.f32.mxu0 %v485
    %763 = vmatmul.mubr.f32.gmra.mrb[0].mxu0 %v484
    %v764 = vpop.f32.mrb[0].mxu0
    %v765 = vadd.f32 %v571, %v764
    %v766 = vpop.f32.mrb[0].mxu0
    %767 = vmatprep.mubr.f32.mxu0 %v489
    %768 = vmatmul.mubr.f32.gmra.mrb[0].mxu0 %v488
    %v769 = vpop.f32.mrb[0].mxu0
    %v770 = vadd.f32 %v571, %v769
    %v771 = vpop.f32.mrb[0].mxu0
    %772 = vmatprep.mubr.f32.mxu0 %v493
    %773 = vmatmul.mubr.f32.gmra.mrb[0].mxu0 %v492
    %v774 = vpop.f32.mrb[0].mxu0
    %v775 = vadd.f32 %v571, %v774
    %v776 = vpop.f32.mrb[0].mxu0
    %777 = vmatprep.mubr.f32.mxu0 %v497
    %778 = vmatmul.mubr.f32.gmra.mrb[0].mxu0 %v496
    %v779 = vpop.f32.mrb[0].mxu0
    %v780 = vadd.f32 %v571, %v779
    %v781 = vpop.f32.mrb[0].mxu0
    %782 = vmatprep.mubr.f32.mxu0 %v501
    %783 = vmatmul.mubr.f32.gmra.mrb[0].mxu0 %v500
    %v784 = vpop.f32.mrb[0].mxu0
    %v785 = vadd.f32 %v571, %v784
    %v786 = vpop.f32.mrb[0].mxu0
    %787 = vmatprep.mubr.f32.mxu0 %v505
    %788 = vmatmul.mubr.f32.gmra.mrb[0].mxu0 %v504
    %v789 = vpop.f32.mrb[0].mxu0
    %v790 = vadd.f32 %v571, %v789
    %v791 = vpop.f32.mrb[0].mxu0
    %792 = vmatprep.mubr.f32.mxu0 %v509
    %793 = vmatmul.mubr.f32.gmra.mrb[0].mxu0 %v508
    %v794 = vpop.f32.mrb[0].mxu0
    %v795 = vadd.f32 %v571, %v794
    %v796 = vpop.f32.mrb[0].mxu0
    %797 = vmatprep.mubr.f32.mxu0 %v513
    %798 = vmatmul.mubr.f32.gmra.mrb[0].mxu0 %v512
    %v799 = vpop.f32.mrb[0].mxu0
    %v800 = vadd.f32 %v571, %v799
    %v801 = vpop.f32.mrb[0].mxu0
    %802 = vdwg.mxu0
    %803 = vmatprep.subr.mxu0 0.0
    %804 = vmatpush1.msra.mxu0 %v548
    %805 = vmatprep.subr.mxu0 0.0
    %806 = vmatpush1.msra.mxu0 %v549
    %807 = vmatprep.subr.mxu0 0.0
    %808 = vmatpush1.msra.mxu0 %v550
    %809 = vmatprep.subr.mxu0 0.0
    %810 = vmatpush1.msra.mxu0 %v551
    %811 = vmatprep.subr.mxu0 0.0
    %812 = vmatpush1.msra.mxu0 %v552
    %813 = vmatprep.subr.mxu0 0.0
    %814 = vmatpush1.msra.mxu0 %v553
    %815 = vmatprep.subr.mxu0 0.0
    %816 = vmatpush1.msra.mxu0 %v554
    %817 = vmatprep.subr.mxu0 0.0
    %818 = vmatpush1.msra.mxu0 %v555
    %819 = vmatprep.subr.mxu0 0.0
    %820 = vmatpush1.msra.mxu0 %v556
    %821 = vmatprep.subr.mxu0 0.0
    %822 = vmatpush1.msra.mxu0 %v557
    %823 = vmatprep.subr.mxu0 0.0
    %824 = vmatpush1.msra.mxu0 %v558
    %825 = vmatprep.subr.mxu0 0.0
    %826 = vmatpush1.msra.mxu0 %v559
    %827 = vmatprep.subr.mxu0 0.0
    %828 = vmatpush1.msra.mxu0 %v560
    %829 = vmatprep.subr.mxu0 0.0
    %830 = vmatpush1.msra.mxu0 %v561
    %831 = vmatprep.subr.mxu0 0.0
    %832 = vmatpush1.msra.mxu0 %v562
    %833 = vmatprep.subr.mxu0 0.0
    %834 = vmatpush1.msra.mxu0 %v563
    %835 = vmatprep.subr.mxu0 0.0
    %836 = vmatpush1.msra.mxu0 %v564
    %837 = vmatprep.subr.mxu0 0.0
    %838 = vmatpush1.msra.mxu0 %v636
    %839 = vmatprep.subr.mxu0 0.0
    %840 = vmatpush1.msra.mxu0 0.0
    %841 = vmatprep.subr.mxu0 0.0
    %842 = vmatpush1.msra.mxu0 0.0
    %843 = vmatprep.subr.mxu0 0.0
    %844 = vmatpush1.msra.mxu0 0.0
    %845 = vmatprep.subr.mxu0 0.0
    %846 = vmatpush1.msra.mxu0 0.0
    %847 = vmatprep.subr.mxu0 0.0
    %848 = vmatpush1.msra.mxu0 0.0
    %849 = vmatprep.subr.mxu0 0.0
    %850 = vmatpush1.msra.mxu0 0.0
    %851 = vmatprep.subr.mxu0 0.0
    %852 = vmatpush1.msra.mxu0 0.0
    %853 = vmatprep.subr.mxu0 0.0
    %854 = vmatpush1.msra.mxu0 0.0
    %855 = vmatprep.subr.mxu0 0.0
    %856 = vmatpush1.msra.mxu0 0.0
    %857 = vmatprep.subr.mxu0 0.0
    %858 = vmatpush1.msra.mxu0 0.0
    %859 = vmatprep.subr.mxu0 0.0
    %860 = vmatpush1.msra.mxu0 0.0
    %861 = vmatprep.subr.mxu0 0.0
    %862 = vmatpush1.msra.mxu0 0.0
    %863 = vmatprep.subr.mxu0 0.0
    %864 = vmatpush1.msra.mxu0 0.0
    %865 = vmatprep.subr.mxu0 0.0
    %866 = vmatpush1.msra.mxu0 0.0
    %867 = vmatprep.mubr.f32.mxu0 %v575
    %868 = vmatmul.mubr.f32.gmra.mrb[0].mxu0 %v438
    %v869 = vpop.f32.mrb[0].mxu0
    %v870 = vadd.f32 %v705, %v869
    %v871 = vpop.f32.mrb[0].mxu0
    %872 = vmatprep.mubr.f32.mxu0 %v578
    %873 = vmatmul.mubr.f32.gmra.mrb[0].mxu0 %v442
    %v874 = vpop.f32.mrb[0].mxu0
    %v875 = vadd.f32 %v710, %v874
    %v876 = vpop.f32.mrb[0].mxu0
    %877 = vmatprep.mubr.f32.mxu0 %v581
    %878 = vmatmul.mubr.f32.gmra.mrb[0].mxu0 %v446
    %v879 = vpop.f32.mrb[0].mxu0
    %v880 = vadd.f32 %v715, %v879
    %v881 = vpop.f32.mrb[0].mxu0
    %882 = vmatprep.mubr.f32.mxu0 %v584
    %883 = vmatmul.mubr.f32.gmra.mrb[0].mxu0 %v450
    %v884 = vpop.f32.mrb[0].mxu0
    %v885 = vadd.f32 %v720, %v884
    %v886 = vpop.f32.mrb[0].mxu0
    %887 = vmatprep.mubr.f32.mxu0 %v587
    %888 = vmatmul.mubr.f32.gmra.mrb[0].mxu0 %v454
    %v889 = vpop.f32.mrb[0].mxu0
    %v890 = vadd.f32 %v725, %v889
    %v891 = vpop.f32.mrb[0].mxu0
    %892 = vmatprep.mubr.f32.mxu0 %v590
    %893 = vmatmul.mubr.f32.gmra.mrb[0].mxu0 %v458
    %v894 = vpop.f32.mrb[0].mxu0
    %v895 = vadd.f32 %v730, %v894
    %v896 = vpop.f32.mrb[0].mxu0
    %897 = vmatprep.mubr.f32.mxu0 %v593
    %898 = vmatmul.mubr.f32.gmra.mrb[0].mxu0 %v462
    %v899 = vpop.f32.mrb[0].mxu0
    %v900 = vadd.f32 %v735, %v899
    %v901 = vpop.f32.mrb[0].mxu0
    %902 = vmatprep.mubr.f32.mxu0 %v596
    %903 = vmatmul.mubr.f32.gmra.mrb[0].mxu0 %v466
    %v904 = vpop.f32.mrb[0].mxu0
    %v905 = vadd.f32 %v740, %v904
    %v906 = vpop.f32.mrb[0].mxu0
    %907 = vmatprep.mubr.f32.mxu0 %v599
    %908 = vmatmul.mubr.f32.gmra.mrb[0].mxu0 %v470
    %v909 = vpop.f32.mrb[0].mxu0
    %v910 = vadd.f32 %v745, %v909
    %v911 = vpop.f32.mrb[0].mxu0
    %912 = vmatprep.mubr.f32.mxu0 %v602
    %913 = vmatmul.mubr.f32.gmra.mrb[0].mxu0 %v474
    %v914 = vpop.f32.mrb[0].mxu0
    %v915 = vadd.f32 %v750, %v914
    %v916 = vpop.f32.mrb[0].mxu0
    %917 = vmatprep.mubr.f32.mxu0 %v605
    %918 = vmatmul.mubr.f32.gmra.mrb[0].mxu0 %v478
    %v919 = vpop.f32.mrb[0].mxu0
    %v920 = vadd.f32 %v755, %v919
    %v921 = vpop.f32.mrb[0].mxu0
    %922 = vmatprep.mubr.f32.mxu0 %v608
    %923 = vmatmul.mubr.f32.gmra.mrb[0].mxu0 %v482
    %v924 = vpop.f32.mrb[0].mxu0
    %v925 = vadd.f32 %v760, %v924
    %v926 = vpop.f32.mrb[0].mxu0
    %927 = vmatprep.mubr.f32.mxu0 %v611
    %928 = vmatmul.mubr.f32.gmra.mrb[0].mxu0 %v486
    %v929 = vpop.f32.mrb[0].mxu0
    %v930 = vadd.f32 %v765, %v929
    %v931 = vpop.f32.mrb[0].mxu0
    %932 = vmatprep.mubr.f32.mxu0 %v614
    %933 = vmatmul.mubr.f32.gmra.mrb[0].mxu0 %v490
    %v934 = vpop.f32.mrb[0].mxu0
    %v935 = vadd.f32 %v770, %v934
    %v936 = vpop.f32.mrb[0].mxu0
    %937 = vmatprep.mubr.f32.mxu0 %v617
    %938 = vmatmul.mubr.f32.gmra.mrb[0].mxu0 %v494
    %v939 = vpop.f32.mrb[0].mxu0
    %v940 = vadd.f32 %v775, %v939
    %v941 = vpop.f32.mrb[0].mxu0
    %942 = vmatprep.mubr.f32.mxu0 %v620
    %943 = vmatmul.mubr.f32.gmra.mrb[0].mxu0 %v498
    %v944 = vpop.f32.mrb[0].mxu0
    %v945 = vadd.f32 %v780, %v944
    %v946 = vpop.f32.mrb[0].mxu0
    %947 = vmatprep.mubr.f32.mxu0 %v623
    %948 = vmatmul.mubr.f32.gmra.mrb[0].mxu0 %v502
    %v949 = vpop.f32.mrb[0].mxu0
    %v950 = vadd.f32 %v785, %v949
    %v951 = vpop.f32.mrb[0].mxu0
    %952 = vmatprep.mubr.f32.mxu0 %v626
    %953 = vmatmul.mubr.f32.gmra.mrb[0].mxu0 %v506
    %v954 = vpop.f32.mrb[0].mxu0
    %v955 = vadd.f32 %v790, %v954
    %v956 = vpop.f32.mrb[0].mxu0
    %957 = vmatprep.mubr.f32.mxu0 %v629
    %958 = vmatmul.mubr.f32.gmra.mrb[0].mxu0 %v510
    %v959 = vpop.f32.mrb[0].mxu0
    %v960 = vadd.f32 %v795, %v959
    %v961 = vpop.f32.mrb[0].mxu0
    %962 = vmatprep.mubr.f32.mxu0 %v632
    %963 = vmatmul.mubr.f32.gmra.mrb[0].mxu0 %v514
    %v964 = vpop.f32.mrb[0].mxu0
    %v965 = vadd.f32 %v800, %v964
    %v966 = vpop.f32.mrb[0].mxu0
    %967 = vdwg.mxu0
    %v968 = vmax.f32 %v870, 0.0
    %v969 = vmax.f32 %v875, 0.0
    %v970 = vmax.f32 %v880, 0.0
    %v971 = vmax.f32 %v885, 0.0
    %v972 = vmax.f32 %v890, 0.0
    %v973 = vmax.f32 %v895, 0.0
    %v974 = vmax.f32 %v900, 0.0
    %v975 = vmax.f32 %v905, 0.0
    %v976 = vmax.f32 %v910, 0.0
    %v977 = vmax.f32 %v915, 0.0
    %v978 = vmax.f32 %v920, 0.0
    %v979 = vmax.f32 %v925, 0.0
    %v980 = vmax.f32 %v930, 0.0
    %v981 = vmax.f32 %v935, 0.0
    %v982 = vmax.f32 %v940, 0.0
    %v983 = vmax.f32 %v945, 0.0
    %v984 = vmax.f32 %v950, 0.0
    %v985 = vmax.f32 %v955, 0.0
    %v986 = vmax.f32 %v960, 0.0
    %v987 = vmax.f32 %v965, 0.0
    %v988 = vld [vmem:[%s2] sm:$0xff]
    %v989 = vld [vmem:[%s2 + $0x8] sm:$0xff]
    %v990 = vld [vmem:[%s2 + $0x10] sm:$0xff]
    %v991 = vld [vmem:[%s2 + $0x18] sm:$0xff]
    %v992 = vld [vmem:[%s2 + $0x20] sm:$0xff]
    %v993 = vld [vmem:[%s2 + $0x28] sm:$0xff]
    %v994 = vld [vmem:[%s2 + $0x30] sm:$0xff]
    %v995 = vld [vmem:[%s2 + $0x38] sm:$0xff]
    %v996 = vld [vmem:[%s2 + $0x40] sm:$0xff]
    %v997 = vld [vmem:[%s2 + $0x48] sm:$0xff]
    %v998 = vld [vmem:[%s2 + $0x50] sm:$0xff]
    %v999 = vld [vmem:[%s2 + $0x58] sm:$0xff]
    %v1000 = vld [vmem:[%s2 + $0x60] sm:$0xff]
    %v1001 = vld [vmem:[%s2 + $0x68] sm:$0xff]
    %v1002 = vld [vmem:[%s2 + $0x70] sm:$0xff]
    %v1003 = vld [vmem:[%s2 + $0x78] sm:$0xff]
    %v1004 = vld [vmem:[%s3] sm:$0xff]
    %v1005 = vld [vmem:[%s3 + $0x8] sm:$0xff]
    %v1006 = vld [vmem:[%s3 + $0x10] sm:$0xff]
    %v1007 = vld [vmem:[%s3 + $0x18] sm:$0xff]
    %vm1008 = vcmask 261120
    %v1010 = vsel %vm1008, %v968, 0
    %v1013 = vsel %vm1008, %v969, 0
    %v1016 = vsel %vm1008, %v970, 0
    %v1019 = vsel %vm1008, %v971, 0
    %v1022 = vsel %vm1008, %v972, 0
    %v1025 = vsel %vm1008, %v973, 0
    %v1028 = vsel %vm1008, %v974, 0
    %v1031 = vsel %vm1008, %v975, 0
    %v1034 = vsel %vm1008, %v976, 0
    %v1037 = vsel %vm1008, %v977, 0
    %1039 = vmatprep.subr.mxu0 0.0
    %1040 = vmatpush1.msra.mxu0 %v1004
    %1041 = vmatprep.subr.mxu0 0.0
    %1042 = vmatpush1.msra.mxu0 %v1005
    %1043 = vmatprep.subr.mxu0 0.0
    %1044 = vmatpush1.msra.mxu0 %v1006
    %1045 = vmatprep.subr.mxu0 0.0
    %1046 = vmatpush1.msra.mxu0 %v1007
    %1047 = vmatprep.subr.mxu0 0.0
    %1048 = vmatpush1.msra.mxu0 0.0
    %1049 = vmatprep.subr.mxu0 0.0
    %1050 = vmatpush1.msra.mxu0 0.0
    %1051 = vmatprep.subr.mxu0 0.0
    %1052 = vmatpush1.msra.mxu0 0.0
    %1053 = vmatprep.subr.mxu0 0.0
    %1054 = vmatpush1.msra.mxu0 0.0
    %1055 = vmatprep.subr.mxu0 0.0
    %1056 = vmatpush1.msra.mxu0 0.0
    %1057 = vmatprep.subr.mxu0 0.0
    %1058 = vmatpush1.msra.mxu0 0.0
    %1059 = vmatprep.subr.mxu0 0.0
    %1060 = vmatpush1.msra.mxu0 0.0
    %1061 = vmatprep.subr.mxu0 0.0
    %1062 = vmatpush1.msra.mxu0 0.0
    %1063 = vmatprep.subr.mxu0 0.0
    %1064 = vmatpush1.msra.mxu0 0.0
    %1065 = vmatprep.subr.mxu0 0.0
    %1066 = vmatpush1.msra.mxu0 0.0
    %1067 = vmatprep.subr.mxu0 0.0
    %1068 = vmatpush1.msra.mxu0 0.0
    %1069 = vmatprep.subr.mxu0 0.0
    %1070 = vmatpush1.msra.mxu0 0.0
    %1071 = vmatprep.subr.mxu0 0.0
    %1072 = vmatpush1.msra.mxu0 0.0
    %1073 = vmatprep.subr.mxu0 0.0
    %1074 = vmatpush1.msra.mxu0 0.0
    %1075 = vmatprep.subr.mxu0 0.0
    %1076 = vmatpush1.msra.mxu0 0.0
    %1077 = vmatprep.subr.mxu0 0.0
    %1078 = vmatpush1.msra.mxu0 0.0
    %1079 = vmatprep.subr.mxu0 0.0
    %1080 = vmatpush1.msra.mxu0 0.0
    %1081 = vmatprep.subr.mxu0 0.0
    %1082 = vmatpush1.msra.mxu0 0.0
    %1083 = vmatprep.subr.mxu0 0.0
    %1084 = vmatpush1.msra.mxu0 0.0
    %1085 = vmatprep.subr.mxu0 0.0
    %1086 = vmatpush1.msra.mxu0 0.0
    %1087 = vmatprep.subr.mxu0 0.0
    %1088 = vmatpush1.msra.mxu0 0.0
    %1089 = vmatprep.subr.mxu0 0.0
    %1090 = vmatpush1.msra.mxu0 0.0
    %1091 = vmatprep.subr.mxu0 0.0
    %1092 = vmatpush1.msra.mxu0 0.0
    %1093 = vmatprep.subr.mxu0 0.0
    %1094 = vmatpush1.msra.mxu0 0.0
    %1095 = vmatprep.subr.mxu0 0.0
    %1096 = vmatpush1.msra.mxu0 0.0
    %1097 = vmatprep.subr.mxu0 0.0
    %1098 = vmatpush1.msra.mxu0 0.0
    %1099 = vmatprep.subr.mxu0 0.0
    %1100 = vmatpush1.msra.mxu0 0.0
    %1101 = vmatprep.subr.mxu0 0.0
    %1102 = vmatpush1.msra.mxu0 0.0
    %1103 = vmatprep.mubr.f32.mxu0 0.0
    %1104 = vmatmul.mubr.f32.gmra.mrb[0].mxu0 %v1010
    %v1105 = vpop.f32.mrb[0].mxu0
    %v1106 = vadd.f32 0.0, %v1105
    %v1107 = vpop.f32.mrb[0].mxu0
    %1108 = vmatprep.mubr.f32.mxu0 0.0
    %1109 = vmatmul.mubr.f32.gmra.mrb[0].mxu0 %v1013
    %v1110 = vpop.f32.mrb[0].mxu0
    %v1111 = vadd.f32 0.0, %v1110
    %v1112 = vpop.f32.mrb[0].mxu0
    %1113 = vmatprep.mubr.f32.mxu0 0.0
    %1114 = vmatmul.mubr.f32.gmra.mrb[0].mxu0 %v1016
    %v1115 = vpop.f32.mrb[0].mxu0
    %v1116 = vadd.f32 0.0, %v1115
    %v1117 = vpop.f32.mrb[0].mxu0
    %1118 = vmatprep.mubr.f32.mxu0 0.0
    %1119 = vmatmul.mubr.f32.gmra.mrb[0].mxu0 %v1019
    %v1120 = vpop.f32.mrb[0].mxu0
    %v1121 = vadd.f32 0.0, %v1120
    %v1122 = vpop.f32.mrb[0].mxu0
    %1123 = vmatprep.mubr.f32.mxu0 0.0
    %1124 = vmatmul.mubr.f32.gmra.mrb[0].mxu0 %v1022
    %v1125 = vpop.f32.mrb[0].mxu0
    %v1126 = vadd.f32 0.0, %v1125
    %v1127 = vpop.f32.mrb[0].mxu0
    %1128 = vmatprep.mubr.f32.mxu0 0.0
    %1129 = vmatmul.mubr.f32.gmra.mrb[0].mxu0 %v1025
    %v1130 = vpop.f32.mrb[0].mxu0
    %v1131 = vadd.f32 0.0, %v1130
    %v1132 = vpop.f32.mrb[0].mxu0
    %1133 = vmatprep.mubr.f32.mxu0 0.0
    %1134 = vmatmul.mubr.f32.gmra.mrb[0].mxu0 %v1028
    %v1135 = vpop.f32.mrb[0].mxu0
    %v1136 = vadd.f32 0.0, %v1135
    %v1137 = vpop.f32.mrb[0].mxu0
    %1138 = vmatprep.mubr.f32.mxu0 0.0
    %1139 = vmatmul.mubr.f32.gmra.mrb[0].mxu0 %v1031
    %v1140 = vpop.f32.mrb[0].mxu0
    %v1141 = vadd.f32 0.0, %v1140
    %v1142 = vpop.f32.mrb[0].mxu0
    %1143 = vmatprep.mubr.f32.mxu0 0.0
    %1144 = vmatmul.mubr.f32.gmra.mrb[0].mxu0 %v1034
    %v1145 = vpop.f32.mrb[0].mxu0
    %v1146 = vadd.f32 0.0, %v1145
    %v1147 = vpop.f32.mrb[0].mxu0
    %1148 = vmatprep.mubr.f32.mxu0 0.0
    %1149 = vmatmul.mubr.f32.gmra.mrb[0].mxu0 %v1037
    %v1150 = vpop.f32.mrb[0].mxu0
    %v1151 = vadd.f32 0.0, %v1150
    %v1152 = vpop.f32.mrb[0].mxu0
    %1153 = vdwg.mxu0
    %1154 = vmatprep.subr.mxu0 0.0
    %1155 = vmatpush1.msra.mxu0 %v988
    %1156 = vmatprep.subr.mxu0 0.0
    %1157 = vmatpush1.msra.mxu0 %v989
    %1158 = vmatprep.subr.mxu0 0.0
    %1159 = vmatpush1.msra.mxu0 %v990
    %1160 = vmatprep.subr.mxu0 0.0
    %1161 = vmatpush1.msra.mxu0 %v991
    %1162 = vmatprep.subr.mxu0 0.0
    %1163 = vmatpush1.msra.mxu0 %v992
    %1164 = vmatprep.subr.mxu0 0.0
    %1165 = vmatpush1.msra.mxu0 %v993
    %1166 = vmatprep.subr.mxu0 0.0
    %1167 = vmatpush1.msra.mxu0 %v994
    %1168 = vmatprep.subr.mxu0 0.0
    %1169 = vmatpush1.msra.mxu0 %v995
    %1170 = vmatprep.subr.mxu0 0.0
    %1171 = vmatpush1.msra.mxu0 %v996
    %1172 = vmatprep.subr.mxu0 0.0
    %1173 = vmatpush1.msra.mxu0 %v997
    %1174 = vmatprep.subr.mxu0 0.0
    %1175 = vmatpush1.msra.mxu0 %v998
    %1176 = vmatprep.subr.mxu0 0.0
    %1177 = vmatpush1.msra.mxu0 %v999
    %1178 = vmatprep.subr.mxu0 0.0
    %1179 = vmatpush1.msra.mxu0 %v1000
    %1180 = vmatprep.subr.mxu0 0.0
    %1181 = vmatpush1.msra.mxu0 %v1001
    %1182 = vmatprep.subr.mxu0 0.0
    %1183 = vmatpush1.msra.mxu0 %v1002
    %1184 = vmatprep.subr.mxu0 0.0
    %1185 = vmatpush1.msra.mxu0 %v1003
    %1186 = vmatprep.subr.mxu0 0.0
    %1187 = vmatpush1.msra.mxu0 0.0
    %1188 = vmatprep.subr.mxu0 0.0
    %1189 = vmatpush1.msra.mxu0 0.0
    %1190 = vmatprep.subr.mxu0 0.0
    %1191 = vmatpush1.msra.mxu0 0.0
    %1192 = vmatprep.subr.mxu0 0.0
    %1193 = vmatpush1.msra.mxu0 0.0
    %1194 = vmatprep.subr.mxu0 0.0
    %1195 = vmatpush1.msra.mxu0 0.0
    %1196 = vmatprep.subr.mxu0 0.0
    %1197 = vmatpush1.msra.mxu0 0.0
    %1198 = vmatprep.subr.mxu0 0.0
    %1199 = vmatpush1.msra.mxu0 0.0
    %1200 = vmatprep.subr.mxu0 0.0
    %1201 = vmatpush1.msra.mxu0 0.0
    %1202 = vmatprep.subr.mxu0 0.0
    %1203 = vmatpush1.msra.mxu0 0.0
    %1204 = vmatprep.subr.mxu0 0.0
    %1205 = vmatpush1.msra.mxu0 0.0
    %1206 = vmatprep.subr.mxu0 0.0
    %1207 = vmatpush1.msra.mxu0 0.0
    %1208 = vmatprep.subr.mxu0 0.0
    %1209 = vmatpush1.msra.mxu0 0.0
    %1210 = vmatprep.subr.mxu0 0.0
    %1211 = vmatpush1.msra.mxu0 0.0
    %1212 = vmatprep.subr.mxu0 0.0
    %1213 = vmatpush1.msra.mxu0 0.0
    %1214 = vmatprep.subr.mxu0 0.0
    %1215 = vmatpush1.msra.mxu0 0.0
    %1216 = vmatprep.subr.mxu0 0.0
    %1217 = vmatpush1.msra.mxu0 0.0
    %1218 = vmatprep.mubr.f32.mxu0 0.0
    %1219 = vmatmul.mubr.f32.gmra.mrb[0].mxu0 %v436
    %v1220 = vpop.f32.mrb[0].mxu0
    %v1221 = vadd.f32 %v1106, %v1220
    %v1222 = vpop.f32.mrb[0].mxu0
    %1223 = vmatprep.mubr.f32.mxu0 0.0
    %1224 = vmatmul.mubr.f32.gmra.mrb[0].mxu0 %v440
    %v1225 = vpop.f32.mrb[0].mxu0
    %v1226 = vadd.f32 %v1111, %v1225
    %v1227 = vpop.f32.mrb[0].mxu0
    %1228 = vmatprep.mubr.f32.mxu0 0.0
    %1229 = vmatmul.mubr.f32.gmra.mrb[0].mxu0 %v444
    %v1230 = vpop.f32.mrb[0].mxu0
    %v1231 = vadd.f32 %v1116, %v1230
    %v1232 = vpop.f32.mrb[0].mxu0
    %1233 = vmatprep.mubr.f32.mxu0 0.0
    %1234 = vmatmul.mubr.f32.gmra.mrb[0].mxu0 %v448
    %v1235 = vpop.f32.mrb[0].mxu0
    %v1236 = vadd.f32 %v1121, %v1235
    %v1237 = vpop.f32.mrb[0].mxu0
    %1238 = vmatprep.mubr.f32.mxu0 0.0
    %1239 = vmatmul.mubr.f32.gmra.mrb[0].mxu0 %v452
    %v1240 = vpop.f32.mrb[0].mxu0
    %v1241 = vadd.f32 %v1126, %v1240
    %v1242 = vpop.f32.mrb[0].mxu0
    %1243 = vmatprep.mubr.f32.mxu0 0.0
    %1244 = vmatmul.mubr.f32.gmra.mrb[0].mxu0 %v456
    %v1245 = vpop.f32.mrb[0].mxu0
    %v1246 = vadd.f32 %v1131, %v1245
    %v1247 = vpop.f32.mrb[0].mxu0
    %1248 = vmatprep.mubr.f32.mxu0 0.0
    %1249 = vmatmul.mubr.f32.gmra.mrb[0].mxu0 %v460
    %v1250 = vpop.f32.mrb[0].mxu0
    %v1251 = vadd.f32 %v1136, %v1250
    %v1252 = vpop.f32.mrb[0].mxu0
    %1253 = vmatprep.mubr.f32.mxu0 0.0
    %1254 = vmatmul.mubr.f32.gmra.mrb[0].mxu0 %v464
    %v1255 = vpop.f32.mrb[0].mxu0
    %v1256 = vadd.f32 %v1141, %v1255
    %v1257 = vpop.f32.mrb[0].mxu0
    %1258 = vmatprep.mubr.f32.mxu0 0.0
    %1259 = vmatmul.mubr.f32.gmra.mrb[0].mxu0 %v468
    %v1260 = vpop.f32.mrb[0].mxu0
    %v1261 = vadd.f32 %v1146, %v1260
    %v1262 = vpop.f32.mrb[0].mxu0
    %1263 = vmatprep.mubr.f32.mxu0 0.0
    %1264 = vmatmul.mubr.f32.gmra.mrb[0].mxu0 %v472
    %v1265 = vpop.f32.mrb[0].mxu0
    %v1266 = vadd.f32 %v1151, %v1265
    %v1267 = vpop.f32.mrb[0].mxu0
    %1268 = vdwg.mxu0
    %s1269 = scalar_lea.vmem %s2, 128
    %v1270 = vld [vmem:[%s1269] sm:$0xff]
    %v1271 = vld [vmem:[%s1269 + $0x8] sm:$0xff]
    %v1272 = vld [vmem:[%s1269 + $0x10] sm:$0xff]
    %v1273 = vld [vmem:[%s1269 + $0x18] sm:$0xff]
    %v1274 = vld [vmem:[%s1269 + $0x20] sm:$0xff]
    %v1275 = vld [vmem:[%s1269 + $0x28] sm:$0xff]
    %v1276 = vld [vmem:[%s1269 + $0x30] sm:$0xff]
    %v1277 = vld [vmem:[%s1269 + $0x38] sm:$0xff]
    %v1278 = vld [vmem:[%s1269 + $0x40] sm:$0xff]
    %v1279 = vld [vmem:[%s1269 + $0x48] sm:$0xff]
    %v1280 = vld [vmem:[%s1269 + $0x50] sm:$0xff]
    %v1281 = vld [vmem:[%s1269 + $0x58] sm:$0xff]
    %v1282 = vld [vmem:[%s1269 + $0x60] sm:$0xff]
    %v1283 = vld [vmem:[%s1269 + $0x68] sm:$0xff]
    %v1284 = vld [vmem:[%s1269 + $0x70] sm:$0xff]
    %v1285 = vld [vmem:[%s1269 + $0x78] sm:$0xff]
    %s1286 = scalar_lea.vmem %s3, 32
    %v1287 = vld [vmem:[%s1286] sm:$0xff]
    %v1288 = vld [vmem:[%s1286 + $0x8] sm:$0xff]
    %v1289 = vld [vmem:[%s1286 + $0x10] sm:$0xff]
    %v1290 = vld [vmem:[%s1286 + $0x18] sm:$0xff]
    %v1292 = vsel %vm1008, %v978, 0
    %v1295 = vsel %vm1008, %v979, 0
    %v1298 = vsel %vm1008, %v980, 0
    %v1301 = vsel %vm1008, %v981, 0
    %v1304 = vsel %vm1008, %v982, 0
    %v1307 = vsel %vm1008, %v983, 0
    %v1310 = vsel %vm1008, %v984, 0
    %v1313 = vsel %vm1008, %v985, 0
    %v1316 = vsel %vm1008, %v986, 0
    %v1319 = vsel %vm1008, %v987, 0
    %1321 = vmatprep.subr.mxu0 0.0
    %1322 = vmatpush1.msra.mxu0 %v1287
    %1323 = vmatprep.subr.mxu0 0.0
    %1324 = vmatpush1.msra.mxu0 %v1288
    %1325 = vmatprep.subr.mxu0 0.0
    %1326 = vmatpush1.msra.mxu0 %v1289
    %1327 = vmatprep.subr.mxu0 0.0
    %1328 = vmatpush1.msra.mxu0 %v1290
    %1329 = vmatprep.subr.mxu0 0.0
    %1330 = vmatpush1.msra.mxu0 0.0
    %1331 = vmatprep.subr.mxu0 0.0
    %1332 = vmatpush1.msra.mxu0 0.0
    %1333 = vmatprep.subr.mxu0 0.0
    %1334 = vmatpush1.msra.mxu0 0.0
    %1335 = vmatprep.subr.mxu0 0.0
    %1336 = vmatpush1.msra.mxu0 0.0
    %1337 = vmatprep.subr.mxu0 0.0
    %1338 = vmatpush1.msra.mxu0 0.0
    %1339 = vmatprep.subr.mxu0 0.0
    %1340 = vmatpush1.msra.mxu0 0.0
    %1341 = vmatprep.subr.mxu0 0.0
    %1342 = vmatpush1.msra.mxu0 0.0
    %1343 = vmatprep.subr.mxu0 0.0
    %1344 = vmatpush1.msra.mxu0 0.0
    %1345 = vmatprep.subr.mxu0 0.0
    %1346 = vmatpush1.msra.mxu0 0.0
    %1347 = vmatprep.subr.mxu0 0.0
    %1348 = vmatpush1.msra.mxu0 0.0
    %1349 = vmatprep.subr.mxu0 0.0
    %1350 = vmatpush1.msra.mxu0 0.0
    %1351 = vmatprep.subr.mxu0 0.0
    %1352 = vmatpush1.msra.mxu0 0.0
    %1353 = vmatprep.subr.mxu0 0.0
    %1354 = vmatpush1.msra.mxu0 0.0
    %1355 = vmatprep.subr.mxu0 0.0
    %1356 = vmatpush1.msra.mxu0 0.0
    %1357 = vmatprep.subr.mxu0 0.0
    %1358 = vmatpush1.msra.mxu0 0.0
    %1359 = vmatprep.subr.mxu0 0.0
    %1360 = vmatpush1.msra.mxu0 0.0
    %1361 = vmatprep.subr.mxu0 0.0
    %1362 = vmatpush1.msra.mxu0 0.0
    %1363 = vmatprep.subr.mxu0 0.0
    %1364 = vmatpush1.msra.mxu0 0.0
    %1365 = vmatprep.subr.mxu0 0.0
    %1366 = vmatpush1.msra.mxu0 0.0
    %1367 = vmatprep.subr.mxu0 0.0
    %1368 = vmatpush1.msra.mxu0 0.0
    %1369 = vmatprep.subr.mxu0 0.0
    %1370 = vmatpush1.msra.mxu0 0.0
    %1371 = vmatprep.subr.mxu0 0.0
    %1372 = vmatpush1.msra.mxu0 0.0
    %1373 = vmatprep.subr.mxu0 0.0
    %1374 = vmatpush1.msra.mxu0 0.0
    %1375 = vmatprep.subr.mxu0 0.0
    %1376 = vmatpush1.msra.mxu0 0.0
    %1377 = vmatprep.subr.mxu0 0.0
    %1378 = vmatpush1.msra.mxu0 0.0
    %1379 = vmatprep.subr.mxu0 0.0
    %1380 = vmatpush1.msra.mxu0 0.0
    %1381 = vmatprep.subr.mxu0 0.0
    %1382 = vmatpush1.msra.mxu0 0.0
    %1383 = vmatprep.subr.mxu0 0.0
    %1384 = vmatpush1.msra.mxu0 0.0
    %1385 = vmatprep.mubr.f32.mxu0 0.0
    %1386 = vmatmul.mubr.f32.gmra.mrb[0].mxu0 %v1292
    %v1387 = vpop.f32.mrb[0].mxu0
    %v1388 = vadd.f32 0.0, %v1387
    %v1389 = vpop.f32.mrb[0].mxu0
    %1390 = vmatprep.mubr.f32.mxu0 0.0
    %1391 = vmatmul.mubr.f32.gmra.mrb[0].mxu0 %v1295
    %v1392 = vpop.f32.mrb[0].mxu0
    %v1393 = vadd.f32 0.0, %v1392
    %v1394 = vpop.f32.mrb[0].mxu0
    %1395 = vmatprep.mubr.f32.mxu0 0.0
    %1396 = vmatmul.mubr.f32.gmra.mrb[0].mxu0 %v1298
    %v1397 = vpop.f32.mrb[0].mxu0
    %v1398 = vadd.f32 0.0, %v1397
    %v1399 = vpop.f32.mrb[0].mxu0
    %1400 = vmatprep.mubr.f32.mxu0 0.0
    %1401 = vmatmul.mubr.f32.gmra.mrb[0].mxu0 %v1301
    %v1402 = vpop.f32.mrb[0].mxu0
    %v1403 = vadd.f32 0.0, %v1402
    %v1404 = vpop.f32.mrb[0].mxu0
    %1405 = vmatprep.mubr.f32.mxu0 0.0
    %1406 = vmatmul.mubr.f32.gmra.mrb[0].mxu0 %v1304
    %v1407 = vpop.f32.mrb[0].mxu0
    %v1408 = vadd.f32 0.0, %v1407
    %v1409 = vpop.f32.mrb[0].mxu0
    %1410 = vmatprep.mubr.f32.mxu0 0.0
    %1411 = vmatmul.mubr.f32.gmra.mrb[0].mxu0 %v1307
    %v1412 = vpop.f32.mrb[0].mxu0
    %v1413 = vadd.f32 0.0, %v1412
    %v1414 = vpop.f32.mrb[0].mxu0
    %1415 = vmatprep.mubr.f32.mxu0 0.0
    %1416 = vmatmul.mubr.f32.gmra.mrb[0].mxu0 %v1310
    %v1417 = vpop.f32.mrb[0].mxu0
    %v1418 = vadd.f32 0.0, %v1417
    %v1419 = vpop.f32.mrb[0].mxu0
    %1420 = vmatprep.mubr.f32.mxu0 0.0
    %1421 = vmatmul.mubr.f32.gmra.mrb[0].mxu0 %v1313
    %v1422 = vpop.f32.mrb[0].mxu0
    %v1423 = vadd.f32 0.0, %v1422
    %v1424 = vpop.f32.mrb[0].mxu0
    %1425 = vmatprep.mubr.f32.mxu0 0.0
    %1426 = vmatmul.mubr.f32.gmra.mrb[0].mxu0 %v1316
    %v1427 = vpop.f32.mrb[0].mxu0
    %v1428 = vadd.f32 0.0, %v1427
    %v1429 = vpop.f32.mrb[0].mxu0
    %1430 = vmatprep.mubr.f32.mxu0 0.0
    %1431 = vmatmul.mubr.f32.gmra.mrb[0].mxu0 %v1319
    %v1432 = vpop.f32.mrb[0].mxu0
    %v1433 = vadd.f32 0.0, %v1432
    %v1434 = vpop.f32.mrb[0].mxu0
    %1435 = vdwg.mxu0
    %1436 = vmatprep.subr.mxu0 0.0
    %1437 = vmatpush1.msra.mxu0 %v1270
    %1438 = vmatprep.subr.mxu0 0.0
    %1439 = vmatpush1.msra.mxu0 %v1271
    %1440 = vmatprep.subr.mxu0 0.0
    %1441 = vmatpush1.msra.mxu0 %v1272
    %1442 = vmatprep.subr.mxu0 0.0
    %1443 = vmatpush1.msra.mxu0 %v1273
    %1444 = vmatprep.subr.mxu0 0.0
    %1445 = vmatpush1.msra.mxu0 %v1274
    %1446 = vmatprep.subr.mxu0 0.0
    %1447 = vmatpush1.msra.mxu0 %v1275
    %1448 = vmatprep.subr.mxu0 0.0
    %1449 = vmatpush1.msra.mxu0 %v1276
    %1450 = vmatprep.subr.mxu0 0.0
    %1451 = vmatpush1.msra.mxu0 %v1277
    %1452 = vmatprep.subr.mxu0 0.0
    %1453 = vmatpush1.msra.mxu0 %v1278
    %1454 = vmatprep.subr.mxu0 0.0
    %1455 = vmatpush1.msra.mxu0 %v1279
    %1456 = vmatprep.subr.mxu0 0.0
    %1457 = vmatpush1.msra.mxu0 %v1280
    %1458 = vmatprep.subr.mxu0 0.0
    %1459 = vmatpush1.msra.mxu0 %v1281
    %1460 = vmatprep.subr.mxu0 0.0
    %1461 = vmatpush1.msra.mxu0 %v1282
    %1462 = vmatprep.subr.mxu0 0.0
    %1463 = vmatpush1.msra.mxu0 %v1283
    %1464 = vmatprep.subr.mxu0 0.0
    %1465 = vmatpush1.msra.mxu0 %v1284
    %1466 = vmatprep.subr.mxu0 0.0
    %1467 = vmatpush1.msra.mxu0 %v1285
    %1468 = vmatprep.subr.mxu0 0.0
    %1469 = vmatpush1.msra.mxu0 0.0
    %1470 = vmatprep.subr.mxu0 0.0
    %1471 = vmatpush1.msra.mxu0 0.0
    %1472 = vmatprep.subr.mxu0 0.0
    %1473 = vmatpush1.msra.mxu0 0.0
    %1474 = vmatprep.subr.mxu0 0.0
    %1475 = vmatpush1.msra.mxu0 0.0
    %1476 = vmatprep.subr.mxu0 0.0
    %1477 = vmatpush1.msra.mxu0 0.0
    %1478 = vmatprep.subr.mxu0 0.0
    %1479 = vmatpush1.msra.mxu0 0.0
    %1480 = vmatprep.subr.mxu0 0.0
    %1481 = vmatpush1.msra.mxu0 0.0
    %1482 = vmatprep.subr.mxu0 0.0
    %1483 = vmatpush1.msra.mxu0 0.0
    %1484 = vmatprep.subr.mxu0 0.0
    %1485 = vmatpush1.msra.mxu0 0.0
    %1486 = vmatprep.subr.mxu0 0.0
    %1487 = vmatpush1.msra.mxu0 0.0
    %1488 = vmatprep.subr.mxu0 0.0
    %1489 = vmatpush1.msra.mxu0 0.0
    %1490 = vmatprep.subr.mxu0 0.0
    %1491 = vmatpush1.msra.mxu0 0.0
    %1492 = vmatprep.subr.mxu0 0.0
    %1493 = vmatpush1.msra.mxu0 0.0
    %1494 = vmatprep.subr.mxu0 0.0
    %1495 = vmatpush1.msra.mxu0 0.0
    %1496 = vmatprep.subr.mxu0 0.0
    %1497 = vmatpush1.msra.mxu0 0.0
    %1498 = vmatprep.subr.mxu0 0.0
    %1499 = vmatpush1.msra.mxu0 0.0
    %1500 = vmatprep.mubr.f32.mxu0 0.0
    %1501 = vmatmul.mubr.f32.gmra.mrb[0].mxu0 %v476
    %v1502 = vpop.f32.mrb[0].mxu0
    %v1503 = vadd.f32 %v1388, %v1502
    %v1504 = vpop.f32.mrb[0].mxu0
    %1505 = vmatprep.mubr.f32.mxu0 0.0
    %1506 = vmatmul.mubr.f32.gmra.mrb[0].mxu0 %v480
    %v1507 = vpop.f32.mrb[0].mxu0
    %v1508 = vadd.f32 %v1393, %v1507
    %v1509 = vpop.f32.mrb[0].mxu0
    %1510 = vmatprep.mubr.f32.mxu0 0.0
    %1511 = vmatmul.mubr.f32.gmra.mrb[0].mxu0 %v484
    %v1512 = vpop.f32.mrb[0].mxu0
    %v1513 = vadd.f32 %v1398, %v1512
    %v1514 = vpop.f32.mrb[0].mxu0
    %1515 = vmatprep.mubr.f32.mxu0 0.0
    %1516 = vmatmul.mubr.f32.gmra.mrb[0].mxu0 %v488
    %v1517 = vpop.f32.mrb[0].mxu0
    %v1518 = vadd.f32 %v1403, %v1517
    %v1519 = vpop.f32.mrb[0].mxu0
    %1520 = vmatprep.mubr.f32.mxu0 0.0
    %1521 = vmatmul.mubr.f32.gmra.mrb[0].mxu0 %v492
    %v1522 = vpop.f32.mrb[0].mxu0
    %v1523 = vadd.f32 %v1408, %v1522
    %v1524 = vpop.f32.mrb[0].mxu0
    %1525 = vmatprep.mubr.f32.mxu0 0.0
    %1526 = vmatmul.mubr.f32.gmra.mrb[0].mxu0 %v496
    %v1527 = vpop.f32.mrb[0].mxu0
    %v1528 = vadd.f32 %v1413, %v1527
    %v1529 = vpop.f32.mrb[0].mxu0
    %1530 = vmatprep.mubr.f32.mxu0 0.0
    %1531 = vmatmul.mubr.f32.gmra.mrb[0].mxu0 %v500
    %v1532 = vpop.f32.mrb[0].mxu0
    %v1533 = vadd.f32 %v1418, %v1532
    %v1534 = vpop.f32.mrb[0].mxu0
    %1535 = vmatprep.mubr.f32.mxu0 0.0
    %1536 = vmatmul.mubr.f32.gmra.mrb[0].mxu0 %v504
    %v1537 = vpop.f32.mrb[0].mxu0
    %v1538 = vadd.f32 %v1423, %v1537
    %v1539 = vpop.f32.mrb[0].mxu0
    %1540 = vmatprep.mubr.f32.mxu0 0.0
    %1541 = vmatmul.mubr.f32.gmra.mrb[0].mxu0 %v508
    %v1542 = vpop.f32.mrb[0].mxu0
    %v1543 = vadd.f32 %v1428, %v1542
    %v1544 = vpop.f32.mrb[0].mxu0
    %1545 = vmatprep.mubr.f32.mxu0 0.0
    %1546 = vmatmul.mubr.f32.gmra.mrb[0].mxu0 %v512
    %v1547 = vpop.f32.mrb[0].mxu0
    %v1548 = vadd.f32 %v1433, %v1547
    %v1549 = vpop.f32.mrb[0].mxu0
    %1550 = vdwg.mxu0
    %v1551 = vadd.f32 %v1221, %v1503
    %v1552 = vadd.f32 %v1226, %v1508
    %v1553 = vadd.f32 %v1231, %v1513
    %v1554 = vadd.f32 %v1236, %v1518
    %v1555 = vadd.f32 %v1241, %v1523
    %v1556 = vadd.f32 %v1246, %v1528
    %v1557 = vadd.f32 %v1251, %v1533
    %v1558 = vadd.f32 %v1256, %v1538
    %v1559 = vadd.f32 %v1261, %v1543
    %v1560 = vadd.f32 %v1266, %v1548
    %v1561 = vld [vmem:[%s4] sm:$0x1]
    %v1563 = vlaneseq
    %v1564 = vshrl.u32 %v1563, 7
    %v1565 = vsub.s32 0, %v1564
    %v1566 = vrot.slane %v1561, %v1565
    %v1568 = vadd.f32 %v1551, %v1566
    %v1569 = vadd.f32 %v1552, %v1566
    %v1570 = vadd.f32 %v1553, %v1566
    %v1571 = vadd.f32 %v1554, %v1566
    %v1572 = vadd.f32 %v1555, %v1566
    %v1573 = vadd.f32 %v1556, %v1566
    %v1574 = vadd.f32 %v1557, %v1566
    %v1575 = vadd.f32 %v1558, %v1566
    %v1576 = vadd.f32 %v1559, %v1566
    %v1577 = vadd.f32 %v1560, %v1566
    %v1578 = vmax.f32 %v1568, 0.0
    %v1579 = vmax.f32 %v1569, 0.0
    %v1580 = vmax.f32 %v1570, 0.0
    %v1581 = vmax.f32 %v1571, 0.0
    %v1582 = vmax.f32 %v1572, 0.0
    %v1583 = vmax.f32 %v1573, 0.0
    %v1584 = vmax.f32 %v1574, 0.0
    %v1585 = vmax.f32 %v1575, 0.0
    %v1586 = vmax.f32 %v1576, 0.0
    %v1587 = vmax.f32 %v1577, 0.0
    %v1588 = vld [vmem:[%s5] sm:$0xff]
    %v1589 = vld [vmem:[%s5 + $0x8] sm:$0xff]
    %v1590 = vld [vmem:[%s5 + $0x10] sm:$0xff]
    %v1591 = vld [vmem:[%s5 + $0x18] sm:$0xff]
    %s1592 = scalar_lea.vmem %s5, 32
    %v1593 = vld [vmem:[%s1592] sm:$0xff]
    %v1594 = vld [vmem:[%s1592 + $0x8] sm:$0xff]
    %v1595 = vld [vmem:[%s1592 + $0x10] sm:$0xff]
    %v1596 = vld [vmem:[%s1592 + $0x18] sm:$0xff]
    %v1598 = vsel %vm1008, %v1580, 0
    %v1601 = vsel %vm1008, %v1581, 0
    %1603 = vmatprep.subr.mxu0 0.0
    %1604 = vmatpush1.msra.mxu0 %v1593
    %1605 = vmatprep.subr.mxu0 0.0
    %1606 = vmatpush1.msra.mxu0 %v1594
    %1607 = vmatprep.subr.mxu0 0.0
    %1608 = vmatpush1.msra.mxu0 %v1595
    %1609 = vmatprep.subr.mxu0 0.0
    %1610 = vmatpush1.msra.mxu0 %v1596
    %1611 = vmatprep.subr.mxu0 0.0
    %1612 = vmatpush1.msra.mxu0 0.0
    %1613 = vmatprep.subr.mxu0 0.0
    %1614 = vmatpush1.msra.mxu0 0.0
    %1615 = vmatprep.subr.mxu0 0.0
    %1616 = vmatpush1.msra.mxu0 0.0
    %1617 = vmatprep.subr.mxu0 0.0
    %1618 = vmatpush1.msra.mxu0 0.0
    %1619 = vmatprep.subr.mxu0 0.0
    %1620 = vmatpush1.msra.mxu0 0.0
    %1621 = vmatprep.subr.mxu0 0.0
    %1622 = vmatpush1.msra.mxu0 0.0
    %1623 = vmatprep.subr.mxu0 0.0
    %1624 = vmatpush1.msra.mxu0 0.0
    %1625 = vmatprep.subr.mxu0 0.0
    %1626 = vmatpush1.msra.mxu0 0.0
    %1627 = vmatprep.subr.mxu0 0.0
    %1628 = vmatpush1.msra.mxu0 0.0
    %1629 = vmatprep.subr.mxu0 0.0
    %1630 = vmatpush1.msra.mxu0 0.0
    %1631 = vmatprep.subr.mxu0 0.0
    %1632 = vmatpush1.msra.mxu0 0.0
    %1633 = vmatprep.subr.mxu0 0.0
    %1634 = vmatpush1.msra.mxu0 0.0
    %1635 = vmatprep.subr.mxu0 0.0
    %1636 = vmatpush1.msra.mxu0 0.0
    %1637 = vmatprep.subr.mxu0 0.0
    %1638 = vmatpush1.msra.mxu0 0.0
    %1639 = vmatprep.subr.mxu0 0.0
    %1640 = vmatpush1.msra.mxu0 0.0
    %1641 = vmatprep.subr.mxu0 0.0
    %1642 = vmatpush1.msra.mxu0 0.0
    %1643 = vmatprep.subr.mxu0 0.0
    %1644 = vmatpush1.msra.mxu0 0.0
    %1645 = vmatprep.subr.mxu0 0.0
    %1646 = vmatpush1.msra.mxu0 0.0
    %1647 = vmatprep.subr.mxu0 0.0
    %1648 = vmatpush1.msra.mxu0 0.0
    %1649 = vmatprep.subr.mxu0 0.0
    %1650 = vmatpush1.msra.mxu0 0.0
    %1651 = vmatprep.subr.mxu0 0.0
    %1652 = vmatpush1.msra.mxu0 0.0
    %1653 = vmatprep.subr.mxu0 0.0
    %1654 = vmatpush1.msra.mxu0 0.0
    %1655 = vmatprep.subr.mxu0 0.0
    %1656 = vmatpush1.msra.mxu0 0.0
    %1657 = vmatprep.subr.mxu0 0.0
    %1658 = vmatpush1.msra.mxu0 0.0
    %1659 = vmatprep.subr.mxu0 0.0
    %1660 = vmatpush1.msra.mxu0 0.0
    %1661 = vmatprep.subr.mxu0 0.0
    %1662 = vmatpush1.msra.mxu0 0.0
    %1663 = vmatprep.subr.mxu0 0.0
    %1664 = vmatpush1.msra.mxu0 0.0
    %1665 = vmatprep.subr.mxu0 0.0
    %1666 = vmatpush1.msra.mxu0 0.0
    %1667 = vmatprep.mubr.f32.mxu0 0.0
    %1668 = vmatmul.mubr.f32.gmra.mrb[0].mxu0 %v1598
    %v1669 = vpop.f32.mrb[0].mxu0
    %v1670 = vadd.f32 0.0, %v1669
    %v1671 = vpop.f32.mrb[0].mxu0
    %1672 = vmatprep.mubr.f32.mxu0 0.0
    %1673 = vmatmul.mubr.f32.gmra.mrb[0].mxu0 %v1601
    %v1674 = vpop.f32.mrb[0].mxu0
    %v1675 = vadd.f32 0.0, %v1674
    %v1676 = vpop.f32.mrb[0].mxu0
    %1677 = vdwg.mxu0
    %v1679 = vsel %vm1008, %v1578, 0
    %v1682 = vsel %vm1008, %v1579, 0
    %1684 = vmatprep.subr.mxu0 0.0
    %1685 = vmatpush1.msra.mxu0 %v1588
    %1686 = vmatprep.subr.mxu0 0.0
    %1687 = vmatpush1.msra.mxu0 %v1589
    %1688 = vmatprep.subr.mxu0 0.0
    %1689 = vmatpush1.msra.mxu0 %v1590
    %1690 = vmatprep.subr.mxu0 0.0
    %1691 = vmatpush1.msra.mxu0 %v1591
    %1692 = vmatprep.subr.mxu0 0.0
    %1693 = vmatpush1.msra.mxu0 0.0
    %1694 = vmatprep.subr.mxu0 0.0
    %1695 = vmatpush1.msra.mxu0 0.0
    %1696 = vmatprep.subr.mxu0 0.0
    %1697 = vmatpush1.msra.mxu0 0.0
    %1698 = vmatprep.subr.mxu0 0.0
    %1699 = vmatpush1.msra.mxu0 0.0
    %1700 = vmatprep.subr.mxu0 0.0
    %1701 = vmatpush1.msra.mxu0 0.0
    %1702 = vmatprep.subr.mxu0 0.0
    %1703 = vmatpush1.msra.mxu0 0.0
    %1704 = vmatprep.subr.mxu0 0.0
    %1705 = vmatpush1.msra.mxu0 0.0
    %1706 = vmatprep.subr.mxu0 0.0
    %1707 = vmatpush1.msra.mxu0 0.0
    %1708 = vmatprep.subr.mxu0 0.0
    %1709 = vmatpush1.msra.mxu0 0.0
    %1710 = vmatprep.subr.mxu0 0.0
    %1711 = vmatpush1.msra.mxu0 0.0
    %1712 = vmatprep.subr.mxu0 0.0
    %1713 = vmatpush1.msra.mxu0 0.0
    %1714 = vmatprep.subr.mxu0 0.0
    %1715 = vmatpush1.msra.mxu0 0.0
    %1716 = vmatprep.subr.mxu0 0.0
    %1717 = vmatpush1.msra.mxu0 0.0
    %1718 = vmatprep.subr.mxu0 0.0
    %1719 = vmatpush1.msra.mxu0 0.0
    %1720 = vmatprep.subr.mxu0 0.0
    %1721 = vmatpush1.msra.mxu0 0.0
    %1722 = vmatprep.subr.mxu0 0.0
    %1723 = vmatpush1.msra.mxu0 0.0
    %1724 = vmatprep.subr.mxu0 0.0
    %1725 = vmatpush1.msra.mxu0 0.0
    %1726 = vmatprep.subr.mxu0 0.0
    %1727 = vmatpush1.msra.mxu0 0.0
    %1728 = vmatprep.subr.mxu0 0.0
    %1729 = vmatpush1.msra.mxu0 0.0
    %1730 = vmatprep.subr.mxu0 0.0
    %1731 = vmatpush1.msra.mxu0 0.0
    %1732 = vmatprep.subr.mxu0 0.0
    %1733 = vmatpush1.msra.mxu0 0.0
    %1734 = vmatprep.subr.mxu0 0.0
    %1735 = vmatpush1.msra.mxu0 0.0
    %1736 = vmatprep.subr.mxu0 0.0
    %1737 = vmatpush1.msra.mxu0 0.0
    %1738 = vmatprep.subr.mxu0 0.0
    %1739 = vmatpush1.msra.mxu0 0.0
    %1740 = vmatprep.subr.mxu0 0.0
    %1741 = vmatpush1.msra.mxu0 0.0
    %1742 = vmatprep.subr.mxu0 0.0
    %1743 = vmatpush1.msra.mxu0 0.0
    %1744 = vmatprep.subr.mxu0 0.0
    %1745 = vmatpush1.msra.mxu0 0.0
    %1746 = vmatprep.subr.mxu0 0.0
    %1747 = vmatpush1.msra.mxu0 0.0
    %1748 = vmatprep.mubr.f32.mxu0 0.0
    %1749 = vmatmul.mubr.f32.gmra.mrb[0].mxu0 %v1679
    %v1750 = vpop.f32.mrb[0].mxu0
    %v1751 = vadd.f32 %v1670, %v1750
    %v1752 = vpop.f32.mrb[0].mxu0
    %1753 = vmatprep.mubr.f32.mxu0 0.0
    %1754 = vmatmul.mubr.f32.gmra.mrb[0].mxu0 %v1682
    %v1755 = vpop.f32.mrb[0].mxu0
    %v1756 = vadd.f32 %v1675, %v1755
    %v1757 = vpop.f32.mrb[0].mxu0
    %1758 = vdwg.mxu0
    %s1759 = scalar_lea.vmem %s5, 64
    %v1760 = vld [vmem:[%s1759] sm:$0xff]
    %v1761 = vld [vmem:[%s1759 + $0x8] sm:$0xff]
    %v1762 = vld [vmem:[%s1759 + $0x10] sm:$0xff]
    %v1763 = vld [vmem:[%s1759 + $0x18] sm:$0xff]
    %v1765 = vsel %vm1008, %v1582, 0
    %v1768 = vsel %vm1008, %v1583, 0
    %1770 = vmatprep.subr.mxu0 0.0
    %1771 = vmatpush1.msra.mxu0 %v1760
    %1772 = vmatprep.subr.mxu0 0.0
    %1773 = vmatpush1.msra.mxu0 %v1761
    %1774 = vmatprep.subr.mxu0 0.0
    %1775 = vmatpush1.msra.mxu0 %v1762
    %1776 = vmatprep.subr.mxu0 0.0
    %1777 = vmatpush1.msra.mxu0 %v1763
    %1778 = vmatprep.subr.mxu0 0.0
    %1779 = vmatpush1.msra.mxu0 0.0
    %1780 = vmatprep.subr.mxu0 0.0
    %1781 = vmatpush1.msra.mxu0 0.0
    %1782 = vmatprep.subr.mxu0 0.0
    %1783 = vmatpush1.msra.mxu0 0.0
    %1784 = vmatprep.subr.mxu0 0.0
    %1785 = vmatpush1.msra.mxu0 0.0
    %1786 = vmatprep.subr.mxu0 0.0
    %1787 = vmatpush1.msra.mxu0 0.0
    %1788 = vmatprep.subr.mxu0 0.0
    %1789 = vmatpush1.msra.mxu0 0.0
    %1790 = vmatprep.subr.mxu0 0.0
    %1791 = vmatpush1.msra.mxu0 0.0
    %1792 = vmatprep.subr.mxu0 0.0
    %1793 = vmatpush1.msra.mxu0 0.0
    %1794 = vmatprep.subr.mxu0 0.0
    %1795 = vmatpush1.msra.mxu0 0.0
    %1796 = vmatprep.subr.mxu0 0.0
    %1797 = vmatpush1.msra.mxu0 0.0
    %1798 = vmatprep.subr.mxu0 0.0
    %1799 = vmatpush1.msra.mxu0 0.0
    %1800 = vmatprep.subr.mxu0 0.0
    %1801 = vmatpush1.msra.mxu0 0.0
    %1802 = vmatprep.subr.mxu0 0.0
    %1803 = vmatpush1.msra.mxu0 0.0
    %1804 = vmatprep.subr.mxu0 0.0
    %1805 = vmatpush1.msra.mxu0 0.0
    %1806 = vmatprep.subr.mxu0 0.0
    %1807 = vmatpush1.msra.mxu0 0.0
    %1808 = vmatprep.subr.mxu0 0.0
    %1809 = vmatpush1.msra.mxu0 0.0
    %1810 = vmatprep.subr.mxu0 0.0
    %1811 = vmatpush1.msra.mxu0 0.0
    %1812 = vmatprep.subr.mxu0 0.0
    %1813 = vmatpush1.msra.mxu0 0.0
    %1814 = vmatprep.subr.mxu0 0.0
    %1815 = vmatpush1.msra.mxu0 0.0
    %1816 = vmatprep.subr.mxu0 0.0
    %1817 = vmatpush1.msra.mxu0 0.0
    %1818 = vmatprep.subr.mxu0 0.0
    %1819 = vmatpush1.msra.mxu0 0.0
    %1820 = vmatprep.subr.mxu0 0.0
    %1821 = vmatpush1.msra.mxu0 0.0
    %1822 = vmatprep.subr.mxu0 0.0
    %1823 = vmatpush1.msra.mxu0 0.0
    %1824 = vmatprep.subr.mxu0 0.0
    %1825 = vmatpush1.msra.mxu0 0.0
    %1826 = vmatprep.subr.mxu0 0.0
    %1827 = vmatpush1.msra.mxu0 0.0
    %1828 = vmatprep.subr.mxu0 0.0
    %1829 = vmatpush1.msra.mxu0 0.0
    %1830 = vmatprep.subr.mxu0 0.0
    %1831 = vmatpush1.msra.mxu0 0.0
    %1832 = vmatprep.subr.mxu0 0.0
    %1833 = vmatpush1.msra.mxu0 0.0
    %1834 = vmatprep.mubr.f32.mxu0 0.0
    %1835 = vmatmul.mubr.f32.gmra.mrb[0].mxu0 %v1765
    %v1836 = vpop.f32.mrb[0].mxu0
    %v1837 = vadd.f32 0.0, %v1836
    %v1838 = vpop.f32.mrb[0].mxu0
    %1839 = vmatprep.mubr.f32.mxu0 0.0
    %1840 = vmatmul.mubr.f32.gmra.mrb[0].mxu0 %v1768
    %v1841 = vpop.f32.mrb[0].mxu0
    %v1842 = vadd.f32 0.0, %v1841
    %v1843 = vpop.f32.mrb[0].mxu0
    %1844 = vdwg.mxu0
    %v1845 = vadd.f32 %v1751, %v1837
    %v1846 = vadd.f32 %v1756, %v1842
    %s1847 = scalar_lea.vmem %s5, 96
    %v1848 = vld [vmem:[%s1847] sm:$0xff]
    %v1849 = vld [vmem:[%s1847 + $0x8] sm:$0xff]
    %v1850 = vld [vmem:[%s1847 + $0x10] sm:$0xff]
    %v1851 = vld [vmem:[%s1847 + $0x18] sm:$0xff]
    %v1853 = vsel %vm1008, %v1584, 0
    %v1856 = vsel %vm1008, %v1585, 0
    %1858 = vmatprep.subr.mxu0 0.0
    %1859 = vmatpush1.msra.mxu0 %v1848
    %1860 = vmatprep.subr.mxu0 0.0
    %1861 = vmatpush1.msra.mxu0 %v1849
    %1862 = vmatprep.subr.mxu0 0.0
    %1863 = vmatpush1.msra.mxu0 %v1850
    %1864 = vmatprep.subr.mxu0 0.0
    %1865 = vmatpush1.msra.mxu0 %v1851
    %1866 = vmatprep.subr.mxu0 0.0
    %1867 = vmatpush1.msra.mxu0 0.0
    %1868 = vmatprep.subr.mxu0 0.0
    %1869 = vmatpush1.msra.mxu0 0.0
    %1870 = vmatprep.subr.mxu0 0.0
    %1871 = vmatpush1.msra.mxu0 0.0
    %1872 = vmatprep.subr.mxu0 0.0
    %1873 = vmatpush1.msra.mxu0 0.0
    %1874 = vmatprep.subr.mxu0 0.0
    %1875 = vmatpush1.msra.mxu0 0.0
    %1876 = vmatprep.subr.mxu0 0.0
    %1877 = vmatpush1.msra.mxu0 0.0
    %1878 = vmatprep.subr.mxu0 0.0
    %1879 = vmatpush1.msra.mxu0 0.0
    %1880 = vmatprep.subr.mxu0 0.0
    %1881 = vmatpush1.msra.mxu0 0.0
    %1882 = vmatprep.subr.mxu0 0.0
    %1883 = vmatpush1.msra.mxu0 0.0
    %1884 = vmatprep.subr.mxu0 0.0
    %1885 = vmatpush1.msra.mxu0 0.0
    %1886 = vmatprep.subr.mxu0 0.0
    %1887 = vmatpush1.msra.mxu0 0.0
    %1888 = vmatprep.subr.mxu0 0.0
    %1889 = vmatpush1.msra.mxu0 0.0
    %1890 = vmatprep.subr.mxu0 0.0
    %1891 = vmatpush1.msra.mxu0 0.0
    %1892 = vmatprep.subr.mxu0 0.0
    %1893 = vmatpush1.msra.mxu0 0.0
    %1894 = vmatprep.subr.mxu0 0.0
    %1895 = vmatpush1.msra.mxu0 0.0
    %1896 = vmatprep.subr.mxu0 0.0
    %1897 = vmatpush1.msra.mxu0 0.0
    %1898 = vmatprep.subr.mxu0 0.0
    %1899 = vmatpush1.msra.mxu0 0.0
    %1900 = vmatprep.subr.mxu0 0.0
    %1901 = vmatpush1.msra.mxu0 0.0
    %1902 = vmatprep.subr.mxu0 0.0
    %1903 = vmatpush1.msra.mxu0 0.0
    %1904 = vmatprep.subr.mxu0 0.0
    %1905 = vmatpush1.msra.mxu0 0.0
    %1906 = vmatprep.subr.mxu0 0.0
    %1907 = vmatpush1.msra.mxu0 0.0
    %1908 = vmatprep.subr.mxu0 0.0
    %1909 = vmatpush1.msra.mxu0 0.0
    %1910 = vmatprep.subr.mxu0 0.0
    %1911 = vmatpush1.msra.mxu0 0.0
    %1912 = vmatprep.subr.mxu0 0.0
    %1913 = vmatpush1.msra.mxu0 0.0
    %1914 = vmatprep.subr.mxu0 0.0
    %1915 = vmatpush1.msra.mxu0 0.0
    %1916 = vmatprep.subr.mxu0 0.0
    %1917 = vmatpush1.msra.mxu0 0.0
    %1918 = vmatprep.subr.mxu0 0.0
    %1919 = vmatpush1.msra.mxu0 0.0
    %1920 = vmatprep.subr.mxu0 0.0
    %1921 = vmatpush1.msra.mxu0 0.0
    %1922 = vmatprep.mubr.f32.mxu0 0.0
    %1923 = vmatmul.mubr.f32.gmra.mrb[0].mxu0 %v1853
    %v1924 = vpop.f32.mrb[0].mxu0
    %v1925 = vadd.f32 0.0, %v1924
    %v1926 = vpop.f32.mrb[0].mxu0
    %1927 = vmatprep.mubr.f32.mxu0 0.0
    %1928 = vmatmul.mubr.f32.gmra.mrb[0].mxu0 %v1856
    %v1929 = vpop.f32.mrb[0].mxu0
    %v1930 = vadd.f32 0.0, %v1929
    %v1931 = vpop.f32.mrb[0].mxu0
    %1932 = vdwg.mxu0
    %v1933 = vadd.f32 %v1845, %v1925
    %v1934 = vadd.f32 %v1846, %v1930
    %s1935 = scalar_lea.vmem %s5, 128
    %v1936 = vld [vmem:[%s1935] sm:$0xff]
    %v1937 = vld [vmem:[%s1935 + $0x8] sm:$0xff]
    %v1938 = vld [vmem:[%s1935 + $0x10] sm:$0xff]
    %v1939 = vld [vmem:[%s1935 + $0x18] sm:$0xff]
    %v1941 = vsel %vm1008, %v1586, 0
    %v1944 = vsel %vm1008, %v1587, 0
    %1946 = vmatprep.subr.mxu0 0.0
    %1947 = vmatpush1.msra.mxu0 %v1936
    %1948 = vmatprep.subr.mxu0 0.0
    %1949 = vmatpush1.msra.mxu0 %v1937
    %1950 = vmatprep.subr.mxu0 0.0
    %1951 = vmatpush1.msra.mxu0 %v1938
    %1952 = vmatprep.subr.mxu0 0.0
    %1953 = vmatpush1.msra.mxu0 %v1939
    %1954 = vmatprep.subr.mxu0 0.0
    %1955 = vmatpush1.msra.mxu0 0.0
    %1956 = vmatprep.subr.mxu0 0.0
    %1957 = vmatpush1.msra.mxu0 0.0
    %1958 = vmatprep.subr.mxu0 0.0
    %1959 = vmatpush1.msra.mxu0 0.0
    %1960 = vmatprep.subr.mxu0 0.0
    %1961 = vmatpush1.msra.mxu0 0.0
    %1962 = vmatprep.subr.mxu0 0.0
    %1963 = vmatpush1.msra.mxu0 0.0
    %1964 = vmatprep.subr.mxu0 0.0
    %1965 = vmatpush1.msra.mxu0 0.0
    %1966 = vmatprep.subr.mxu0 0.0
    %1967 = vmatpush1.msra.mxu0 0.0
    %1968 = vmatprep.subr.mxu0 0.0
    %1969 = vmatpush1.msra.mxu0 0.0
    %1970 = vmatprep.subr.mxu0 0.0
    %1971 = vmatpush1.msra.mxu0 0.0
    %1972 = vmatprep.subr.mxu0 0.0
    %1973 = vmatpush1.msra.mxu0 0.0
    %1974 = vmatprep.subr.mxu0 0.0
    %1975 = vmatpush1.msra.mxu0 0.0
    %1976 = vmatprep.subr.mxu0 0.0
    %1977 = vmatpush1.msra.mxu0 0.0
    %1978 = vmatprep.subr.mxu0 0.0
    %1979 = vmatpush1.msra.mxu0 0.0
    %1980 = vmatprep.subr.mxu0 0.0
    %1981 = vmatpush1.msra.mxu0 0.0
    %1982 = vmatprep.subr.mxu0 0.0
    %1983 = vmatpush1.msra.mxu0 0.0
    %1984 = vmatprep.subr.mxu0 0.0
    %1985 = vmatpush1.msra.mxu0 0.0
    %1986 = vmatprep.subr.mxu0 0.0
    %1987 = vmatpush1.msra.mxu0 0.0
    %1988 = vmatprep.subr.mxu0 0.0
    %1989 = vmatpush1.msra.mxu0 0.0
    %1990 = vmatprep.subr.mxu0 0.0
    %1991 = vmatpush1.msra.mxu0 0.0
    %1992 = vmatprep.subr.mxu0 0.0
    %1993 = vmatpush1.msra.mxu0 0.0
    %1994 = vmatprep.subr.mxu0 0.0
    %1995 = vmatpush1.msra.mxu0 0.0
    %1996 = vmatprep.subr.mxu0 0.0
    %1997 = vmatpush1.msra.mxu0 0.0
    %1998 = vmatprep.subr.mxu0 0.0
    %1999 = vmatpush1.msra.mxu0 0.0
    %2000 = vmatprep.subr.mxu0 0.0
    %2001 = vmatpush1.msra.mxu0 0.0
    %2002 = vmatprep.subr.mxu0 0.0
    %2003 = vmatpush1.msra.mxu0 0.0
    %2004 = vmatprep.subr.mxu0 0.0
    %2005 = vmatpush1.msra.mxu0 0.0
    %2006 = vmatprep.subr.mxu0 0.0
    %2007 = vmatpush1.msra.mxu0 0.0
    %2008 = vmatprep.subr.mxu0 0.0
    %2009 = vmatpush1.msra.mxu0 0.0
    %2010 = vmatprep.mubr.f32.mxu0 0.0
    %2011 = vmatmul.mubr.f32.gmra.mrb[0].mxu0 %v1941
    %v2012 = vpop.f32.mrb[0].mxu0
    %v2013 = vadd.f32 0.0, %v2012
    %v2014 = vpop.f32.mrb[0].mxu0
    %2015 = vmatprep.mubr.f32.mxu0 0.0
    %2016 = vmatmul.mubr.f32.gmra.mrb[0].mxu0 %v1944
    %v2017 = vpop.f32.mrb[0].mxu0
    %v2018 = vadd.f32 0.0, %v2017
    %v2019 = vpop.f32.mrb[0].mxu0
    %2020 = vdwg.mxu0
    %v2021 = vadd.f32 %v1933, %v2013
    %v2022 = vadd.f32 %v1934, %v2018
    %v2023 = vld [vmem:[%s6] sm:$0x1]
    %v2025 = vlaneseq
    %v2026 = vshrl.u32 %v2025, 7
    %v2027 = vsub.s32 0, %v2026
    %v2028 = vrot.slane %v2023, %v2027
    %v2030 = vadd.f32 %v2021, %v2028
    %v2031 = vadd.f32 %v2022, %v2028
    %v2032 = vmax.f32 %v2030, 0.0
    %v2033 = vmax.f32 %v2031, 0.0
    %v2034 = vld [vmem:[%s7] sm:$0x1]
    %v2036 = vlaneseq
    %v2037 = vshrl.u32 %v2036, 7
    %v2038 = vsub.s32 0, %v2037
    %v2039 = vrot.slane %v2034, %v2038
    %v2041 = vmul.f32 %v2032, %v2039
    %v2042 = vmul.f32 %v2033, %v2039
    %2043 = vxpose.xlu0.b32.start [1/16] %v2041, 128
    %2044 = vxpose.xlu0.b32.cont [2/16] %v2042, 128
    %2045 = vxpose.xlu0.b32.cont [3/16] 0.0, 128
    %2046 = vxpose.xlu0.b32.cont [4/16] 0.0, 128
    %2047 = vxpose.xlu0.b32.cont [5/16] 0.0, 128
    %2048 = vxpose.xlu0.b32.cont [6/16] 0.0, 128
    %2049 = vxpose.xlu0.b32.cont [7/16] 0.0, 128
    %2050 = vxpose.xlu0.b32.cont [8/16] 0.0, 128
    %2051 = vxpose.xlu0.b32.cont [9/16] 0.0, 128
    %2052 = vxpose.xlu0.b32.cont [10/16] 0.0, 128
    %2053 = vxpose.xlu0.b32.cont [11/16] 0.0, 128
    %2054 = vxpose.xlu0.b32.cont [12/16] 0.0, 128
    %2055 = vxpose.xlu0.b32.cont [13/16] 0.0, 128
    %2056 = vxpose.xlu0.b32.cont [14/16] 0.0, 128
    %2057 = vxpose.xlu0.b32.cont [15/16] 0.0, 128
    %2058 = vxpose.xlu0.b32.end [16/16] 0.0, 128
    %v2059 = vpop.trf.xlu0
    %v2060 = vpop.trf.xlu0
    %v2061 = vpop.trf.xlu0
    %v2062 = vpop.trf.xlu0
    %v2063 = vpop.trf.xlu0
    %v2064 = vpop.trf.xlu0
    %v2065 = vpop.trf.xlu0
    %v2066 = vpop.trf.xlu0
    %v2067 = vpop.trf.xlu0
    %v2068 = vpop.trf.xlu0
    %v2069 = vpop.trf.xlu0
    %v2070 = vpop.trf.xlu0
    %v2071 = vpop.trf.xlu0
    %v2072 = vpop.trf.xlu0
    %v2073 = vpop.trf.xlu0
    %v2074 = vpop.trf.xlu0
    %vm2075 = vcmask 130048
    %v2076 = vsel %vm2075, %v2059, 0.0
    %v2077 = vsel %vm2075, %v2060, 0.0
    %v2078 = vadd.f32 %v2076, %v2077
    %v2079 = vsel %vm2075, %v2061, 0.0
    %v2080 = vadd.f32 %v2078, %v2079
    %v2081 = vsel %vm2075, %v2062, 0.0
    %v2082 = vadd.f32 %v2080, %v2081
    %v2083 = vrot.slane %v2082, 4
    %v2084 = vadd.f32 %v2082, %v2083
    %v2085 = vrot.slane %v2084, 2
    %v2086 = vadd.f32 %v2084, %v2085
    %v2087 = vrot.slane %v2086, 1
    %v2088 = vadd.f32 %v2086, %v2087
    %v2089 = vld [vmem:[#allocation2] sm:$0x1]
    %2091 = vset.pattern.permute.xlu0 0
    %2092 = vperm.xlu0 %2091, %v2089
    %v2093 = vpop.permute.xlu0 %2092
    %v2095 = vlaneseq
    %v2096 = vshrl.u32 %v2095, 7
    %v2097 = vsub.s32 0, %v2096
    %v2098 = vrot.slane %v2093, %v2097
    %v2099 = vadd.f32 %v2088, %v2098
    %vm2100 = vcmask 122880
    %2101 = vst.msk [vmem:[#allocation3] sm:$0x1] %vm2100, %v2099
    // Predicated region
    $region42: #{neural_network_dropout.2} parent=1 // pred_check
      _
    $region43: #{neural_network_dropout.2} parent=1 // pred_check_branch
      %2103 = sbr.rel (0) target = $region45
    $region44: #{neural_network_dropout.2} parent=1 // pred_region
      %s2105 = ssub.s32 16, 16
      %2106 = vsyncadd [#allocation4], %s2105
      %s2108 = sshll.u32 [#allocation3], 4
      %s2109 = int_to_ptr.vmem [resolvable:$true] %s2108
      %2111 = dma.vmem_to_hbm [thread:$0]  %s2109, 16, %s10, [#allocation4]
    $region45: #{neural_network_dropout.2} parent=1 // pred_fallthru
      _
    // Predicated region
    $region46: #{neural_network_dropout.2} parent=1 // pred_check
      _
    $region47: #{neural_network_dropout.2} parent=1 // pred_check_branch
      %2113 = sbr.rel (0) target = $region49
    $region48: #{neural_network_dropout.2} parent=1 // pred_region
      %2114 = dma.done [#allocation4], 16
    $region49: #{neural_network_dropout.2} parent=1 // pred_fallthru
      _
    %2115 = vsyncpa [#allocation4], 1

</llo_original>
